<compile_context>
chip_gen: v7x
topology: tpu7x:2x2x1
jax: 0.10.0
libtpu: 0.0.40
codegen_flags: <defaults>
</compile_context>

<pallas_src>
import functools
import math

import jax
import jax.numpy as jnp
from jax.experimental import pallas as pl
from jax.experimental.pallas import tpu as pltpu

_EPS = 1e-5
_LANES = 128
_SUBLANES = 8
# Target bytes per activation tile. Default double-buffering keeps ~2*(in+out)
# = 4 such tiles live (~8 MiB), comfortably under every generation's scoped
# VMEM default (v5e 16 MiB, v6e/v7x 32 MiB).
_TILE_BYTES = 2 * 1024 * 1024


def _ln_folded_kernel(x_ref, w_ref, b_ref, s_ref, o_ref, *, c):
    """Lane-dense path: each 128-lane row holds G = 128//c original rows."""
    x = x_ref[...].astype(jnp.float32)        # (tm, 128), fully lane-dense
    seg = s_ref[...]                          # (128, 128) block-diagonal ones
    inv_c = 1.0 / c
    # Per-lane-group sums via the (otherwise idle) MXU; the matmul result is
    # already broadcast back to every lane of its group. HIGHEST => true f32.
    mu = jnp.dot(x, seg, preferred_element_type=jnp.float32,
                 precision=jax.lax.Precision.HIGHEST) * inv_c
    xc = x - mu
    var = jnp.dot(xc * xc, seg, preferred_element_type=jnp.float32,
                  precision=jax.lax.Precision.HIGHEST) * inv_c   # unbiased=False
    inv = jax.lax.rsqrt(var + _EPS)           # EUP slot, f32
    y = xc * inv * w_ref[...].astype(jnp.float32) + b_ref[...].astype(jnp.float32)
    o_ref[...] = y.astype(o_ref.dtype)


def _ln_rows_kernel(x_ref, w_ref, b_ref, o_ref):
    """Generic path (C >= 128 or not foldable): one row per normalized vector."""
    x = x_ref[...].astype(jnp.float32)        # (tm, C)
    mu = jnp.mean(x, axis=-1, keepdims=True)
    xc = x - mu
    var = jnp.mean(xc * xc, axis=-1, keepdims=True)               # unbiased=False
    inv = jax.lax.rsqrt(var + _EPS)
    y = xc * inv * w_ref[...].astype(jnp.float32) + b_ref[...].astype(jnp.float32)
    o_ref[...] = y.astype(o_ref.dtype)


def _pick_row_tile(n_rows, row_bytes):
    """Byte-budgeted row tile: multiple of 8, or the full row dim if it fits."""
    tm = max(_SUBLANES, _TILE_BYTES // max(1, row_bytes))
    tm = (tm // _SUBLANES) * _SUBLANES
    if tm >= n_rows:
        return n_rows          # one block covering the whole (row) dim — always legal
    return tm                  # ragged last block handled by Pallas boundary masking


def with_bias_layernorm(x, weight, bias):
    """LayerNorm over the last dim with affine weight/bias (PyTorch semantics)."""
    orig_shape = x.shape
    C = orig_shape[-1]
    M = math.prod(orig_shape[:-1]) if len(orig_shape) > 1 else 1
    dtype = x.dtype
    weight = weight.reshape(-1)
    bias = bias.reshape(-1)

    fold = (C < _LANES) and (_LANES % C == 0) and (M % (_LANES // C) == 0)

    if fold:
        # Fold G rows per 128-lane group. Wrapper-side reshape only.
        G = _LANES // C
        L = _LANES
        rows = M // G
        x2 = x.reshape(rows, L)
        w2 = jnp.tile(weight, G).reshape(1, L)   # lane j -> weight[j % C]
        b2 = jnp.tile(bias, G).reshape(1, L)
        gid = jnp.arange(L, dtype=jnp.int32) // C
        seg = (gid[:, None] == gid[None, :]).astype(jnp.float32)   # block-diag ones

        tm = _pick_row_tile(rows, L * x2.dtype.itemsize)
        grid = (pl.cdiv(rows, tm),)
        kernel = functools.partial(_ln_folded_kernel, c=C)
        in_specs = [
            pl.BlockSpec((tm, L), lambda i: (i, 0)),
            pl.BlockSpec((1, L), lambda i: (0, 0)),    # resident across grid steps
            pl.BlockSpec((1, L), lambda i: (0, 0)),
            pl.BlockSpec((L, L), lambda i: (0, 0)),
        ]
        operands = (x2, w2, b2, seg)
        out_rows, out_cols = rows, L
        flops = int(4 * rows * L * L + 8 * rows * L)
        extra_bytes = int(L * L * 4 + 2 * L * 4)
    else:
        x2 = x.reshape(M, C)
        w2 = weight.reshape(1, C)
        b2 = bias.reshape(1, C)

        tm = _pick_row_tile(M, C * x2.dtype.itemsize)
        grid = (pl.cdiv(M, tm),)
        kernel = _ln_rows_kernel
        in_specs = [
            pl.BlockSpec((tm, C), lambda i: (i, 0)),
            pl.BlockSpec((1, C), lambda i: (0, 0)),
            pl.BlockSpec((1, C), lambda i: (0, 0)),
        ]
        operands = (x2, w2, b2)
        out_rows, out_cols = M, C
        flops = int(10 * M * C)
        extra_bytes = int(2 * C * 4)

    cost = pl.CostEstimate(
        flops=flops,
        transcendentals=int(M),                                   # one rsqrt per row
        bytes_accessed=int(2 * M * C * x2.dtype.itemsize) + extra_bytes,
    )

    out = pl.pallas_call(
        kernel,
        out_shape=jax.ShapeDtypeStruct((out_rows, out_cols), dtype),
        grid=grid,
        in_specs=in_specs,
        out_specs=pl.BlockSpec((tm, out_cols), lambda i: (i, 0)),
        compiler_params=pltpu.CompilerParams(
            dimension_semantics=("parallel",),    # rows shard across TCs on v7x
        ),
        cost_estimate=cost,
    )(*operands)

    return out.reshape(orig_shape)


def _ref_layernorm(x, weight, bias):
    xf = x.astype(jnp.float32)
    mu = jnp.mean(xf, axis=-1, keepdims=True)
    var = jnp.mean((xf - mu) ** 2, axis=-1, keepdims=True)
    return (xf - mu) / jnp.sqrt(var + _EPS) * weight.astype(jnp.float32) \
        + bias.astype(jnp.float32)


if __name__ == "__main__":
    key = jax.random.PRNGKey(0)
    k_x, k_w, k_b, k_x2 = jax.random.split(key, 4)

    # (B, H*W, C) token tensor as used in U_SCIFNet (16x16 feature map, 32 ch).
    B, HW, C = 2, 256, 32
    x = jax.random.normal(k_x, (B, HW, C), dtype=jnp.float32)
    weight = 1.0 + 0.1 * jax.random.normal(k_w, (C,), dtype=jnp.float32)
    bias = 0.1 * jax.random.normal(k_b, (C,), dtype=jnp.float32)

    # f32 I/O, lane-folded path.
    out = jax.block_until_ready(with_bias_layernorm(x, weight, bias))
    assert out.shape == x.shape and out.dtype == x.dtype
    assert jnp.allclose(out, _ref_layernorm(x, weight, bias), atol=1e-4, rtol=1e-4)

    # bf16 I/O (native activation dtype; stats still f32 inside the kernel).
    xb = x.astype(jnp.bfloat16)
    out_b = jax.block_until_ready(with_bias_layernorm(xb, weight, bias))
    assert out_b.dtype == jnp.bfloat16
    assert jnp.allclose(out_b.astype(jnp.float32), _ref_layernorm(xb, weight, bias),
                        atol=2e-2, rtol=2e-2)

    # Generic (C >= 128) path: plain per-row lane reduction, no folding.
    xg = jax.random.normal(k_x2, (2, 64, 128), dtype=jnp.float32)
    wg = 1.0 + 0.1 * jax.random.normal(k_w, (128,), dtype=jnp.float32)
    bg = 0.1 * jax.random.normal(k_b, (128,), dtype=jnp.float32)
    out_g = jax.block_until_ready(with_bias_layernorm(xg, wg, bg))
    assert jnp.allclose(out_g, _ref_layernorm(xg, wg, bg), atol=1e-4, rtol=1e-4)

    print("KERNEL_OK")
</pallas_src>

<mosaic_0001>
module attributes {stable_mosaic.version = 11 : i64} {
  func.func @_ln_folded_kernel(%arg0: i32, %arg1: memref<128x128xf32, #tpu.memory_space<vmem>>, %arg2: memref<1x128xf32, #tpu.memory_space<vmem>>, %arg3: memref<1x128xf32, #tpu.memory_space<vmem>>, %arg4: memref<128x128xf32, #tpu.memory_space<vmem>>, %arg5: memref<128x128xf32, #tpu.memory_space<vmem>>) attributes {dimension_semantics = [#tpu.dimension_semantics<parallel>], iteration_bounds = array<i64: 1>, scalar_prefetch = 0 : i64, scratch_operands = 0 : i64, tpu.core_type = #tpu.core_type<tc>, window_params = [{transform_indices = @transform_0, window_bounds = array<i64: 128, 128>}, {pipeline_mode = #tpu.pipeline_mode<synchronous>, transform_indices = @transform_1, window_bounds = array<i64: 1, 128>}, {pipeline_mode = #tpu.pipeline_mode<synchronous>, transform_indices = @transform_2, window_bounds = array<i64: 1, 128>}, {pipeline_mode = #tpu.pipeline_mode<synchronous>, transform_indices = @transform_3, window_bounds = array<i64: 128, 128>}, {transform_indices = @transform_4, window_bounds = array<i64: 128, 128>}]} {
    %c0 = arith.constant 0 : index
    %c0_0 = arith.constant 0 : index
    %0 = vector.load %arg1[%c0, %c0_0] : memref<128x128xf32, #tpu.memory_space<vmem>>, vector<128x128xf32>
    %c0_1 = arith.constant 0 : index
    %c0_2 = arith.constant 0 : index
    %1 = vector.load %arg4[%c0_1, %c0_2] : memref<128x128xf32, #tpu.memory_space<vmem>>, vector<128x128xf32>
    %cst = arith.constant dense<0.000000e+00> : vector<128x128xf32>
    %2 = tpu.matmul %0, %1, %cst {dimension_numbers = #tpu.dot_dimension_numbers<[1], [0], [0], [1], [0, 0, 1, 1], [], []>, precision = #tpu.contract_precision<fp32>} : vector<128x128xf32>, vector<128x128xf32>, vector<128x128xf32> -> vector<128x128xf32>
    %cst_3 = arith.constant 3.125000e-02 : f32
    %3 = vector.broadcast %cst_3 : f32 to vector<128x128xf32>
    %4 = arith.mulf %2, %3 : vector<128x128xf32>
    %5 = arith.subf %0, %4 : vector<128x128xf32>
    %6 = arith.mulf %5, %5 : vector<128x128xf32>
    %cst_4 = arith.constant dense<0.000000e+00> : vector<128x128xf32>
    %7 = tpu.matmul %6, %1, %cst_4 {dimension_numbers = #tpu.dot_dimension_numbers<[1], [0], [0], [1], [0, 0, 1, 1], [], []>, precision = #tpu.contract_precision<fp32>} : vector<128x128xf32>, vector<128x128xf32>, vector<128x128xf32> -> vector<128x128xf32>
    %cst_5 = arith.constant 3.125000e-02 : f32
    %8 = vector.broadcast %cst_5 : f32 to vector<128x128xf32>
    %9 = arith.mulf %7, %8 : vector<128x128xf32>
    %cst_6 = arith.constant 9.99999974E-6 : f32
    %10 = vector.broadcast %cst_6 : f32 to vector<128x128xf32>
    %11 = arith.addf %9, %10 : vector<128x128xf32>
    %12 = math.rsqrt %11 : vector<128x128xf32>
    %13 = arith.mulf %5, %12 : vector<128x128xf32>
    %c0_7 = arith.constant 0 : index
    %c0_8 = arith.constant 0 : index
    %14 = vector.load %arg2[%c0_7, %c0_8] : memref<1x128xf32, #tpu.memory_space<vmem>>, vector<1x128xf32>
    %15 = vector.broadcast %14 : vector<1x128xf32> to vector<128x128xf32>
    %16 = arith.mulf %13, %15 : vector<128x128xf32>
    %c0_9 = arith.constant 0 : index
    %c0_10 = arith.constant 0 : index
    %17 = vector.load %arg3[%c0_9, %c0_10] : memref<1x128xf32, #tpu.memory_space<vmem>>, vector<1x128xf32>
    %18 = vector.broadcast %17 : vector<1x128xf32> to vector<128x128xf32>
    %19 = arith.addf %16, %18 : vector<128x128xf32>
    %c0_11 = arith.constant 0 : index
    %c0_12 = arith.constant 0 : index
    %20 = vector.load %arg5[%c0_11, %c0_12] : memref<128x128xf32, #tpu.memory_space<vmem>>, vector<128x128xf32>
    tpu.vector_store %arg5[%c0_11, %c0_12], %19 {strides = array<i32>} : memref<128x128xf32, #tpu.memory_space<vmem>>, vector<128x128xf32>,
    return
  }
  func.func @transform_0(%arg0: i32) -> (i32, i32) {
    %c0_i32 = arith.constant 0 : i32
    %c0_i32_0 = arith.constant 0 : i32
    return %arg0, %c0_i32 : i32, i32
  }
  func.func @transform_1(%arg0: i32) -> (i32, i32) {
    %c0_i32 = arith.constant 0 : i32
    %c0_i32_0 = arith.constant 0 : i32
    %c0_i32_1 = arith.constant 0 : i32
    return %c0_i32, %c0_i32_0 : i32, i32
  }
  func.func @transform_2(%arg0: i32) -> (i32, i32) {
    %c0_i32 = arith.constant 0 : i32
    %c0_i32_0 = arith.constant 0 : i32
    %c0_i32_1 = arith.constant 0 : i32
    return %c0_i32, %c0_i32_0 : i32, i32
  }
  func.func @transform_3(%arg0: i32) -> (i32, i32) {
    %c0_i32 = arith.constant 0 : i32
    %c0_i32_0 = arith.constant 0 : i32
    %c0_i32_1 = arith.constant 0 : i32
    return %c0_i32, %c0_i32_0 : i32, i32
  }
  func.func @transform_4(%arg0: i32) -> (i32, i32) {
    %c0_i32 = arith.constant 0 : i32
    %c0_i32_0 = arith.constant 0 : i32
    return %arg0, %c0_i32 : i32, i32
  }
}

</mosaic_0001>

<llo_original>
// kernel: tpu_custom_call.1
$region0: #{tpu_custom_call.1}
  #allocation0 [shape = 'u32[]', space=smem, size = 0x4, offset = 0x4, fixed_abs, tag = 'smem constant byte address 0x4 - core index']
  #allocation1 [shape = 'u32[144,128]{1,0:T(1,128)}', space=vmem, size = 0x12000, scoped, tag = 'internal scratch']
  %s0 = inlined_call_operand.hbm [shape: f32[128,128], index: 0, kind: input, shape index: {}]
  %s1 = inlined_call_operand.vmem [shape: f32[1,128], index: 1, kind: input, shape index: {}]
  %s2 = inlined_call_operand.vmem [shape: f32[1,128], index: 2, kind: input, shape index: {}]
  %s3 = inlined_call_operand.hbm [shape: f32[128,128], index: 3, kind: input, shape index: {}]
  %s4 = inlined_call_operand.hbm [shape: f32[128,128], index: 4, kind: output, shape index: {}]
  %s5 = sld [smem:[#allocation0]]
  $region34: #{tpu_custom_call.1} parent=0
    _
  %s7 = ssub.s32 1, %s5
  %s8 = scalar_select 0, %s7, %s5
  $region1: #{tpu_custom_call.1} parent=0
    #allocation2 [shape = 'u8[65536]{0}', space=vmem, size = 0x10000, scoped, tag = 'input window, operand 0, single buffered']
    #allocation3 [shape = 's32[1]{0}', space=sflag, size = 0x4, scoped, tag = 'scoped memory for tpu_custom_call.1']
    #allocation4 [shape = 's32[1]{0}', space=sflag, size = 0x4, scoped, tag = 'scoped memory for tpu_custom_call.1']
    #allocation5 [shape = 'u8[65536]{0}', space=vmem, size = 0x10000, scoped, tag = 'input window, operand 3, single buffered']
    #allocation6 [shape = 's32[1]{0}', space=sflag, size = 0x4, scoped, tag = 'scoped memory for tpu_custom_call.1']
    #allocation7 [shape = 'u8[65536]{0}', space=vmem, size = 0x10000, scoped, tag = 'output window, operand 0, single buffered']
    %9 = vsyncpa [#allocation3], 0
    %10 = vsyncpa [#allocation6], 0
    %11 = vsyncpa [#allocation4], 0
    // Predicated region
    $region2: #{tpu_custom_call.1} parent=1 // pred_check
      _
    $region3: #{tpu_custom_call.1} parent=1 // pred_check_branch
      %13 = sbr.rel (0) target = $region5
    $region4: #{tpu_custom_call.1} parent=1 // pred_region
      %s15 = ssub.s32 2048, 2048
      %16 = vsyncadd [#allocation3], %s15
      %s17 = sshll.u32 [#allocation2], 4
      %s18 = int_to_ptr.vmem [resolvable:$true] %s17
      %23 = dma.hbm_to_vmem [thread:$0]  %s0, 2048, %s18, [#allocation3], 128, 128, 8
    $region5: #{tpu_custom_call.1} parent=1 // pred_fallthru
      _
    // Predicated region
    $region6: #{tpu_custom_call.1} parent=1 // pred_check
      _
    $region7: #{tpu_custom_call.1} parent=1 // pred_check_branch
      %25 = sbr.rel (0) target = $region9
    $region8: #{tpu_custom_call.1} parent=1 // pred_region
      _
    $region9: #{tpu_custom_call.1} parent=1 // pred_fallthru
      _
    // Predicated region
    $region10: #{tpu_custom_call.1} parent=1 // pred_check
      _
    $region11: #{tpu_custom_call.1} parent=1 // pred_check_branch
      %27 = sbr.rel (0) target = $region13
    $region12: #{tpu_custom_call.1} parent=1 // pred_region
      _
    $region13: #{tpu_custom_call.1} parent=1 // pred_fallthru
      _
    // Predicated region
    $region14: #{tpu_custom_call.1} parent=1 // pred_check
      _
    $region15: #{tpu_custom_call.1} parent=1 // pred_check_branch
      %29 = sbr.rel (0) target = $region17
    $region16: #{tpu_custom_call.1} parent=1 // pred_region
      %s31 = ssub.s32 2048, 2048
      %32 = vsyncadd [#allocation6], %s31
      %s33 = sshll.u32 [#allocation5], 4
      %s34 = int_to_ptr.vmem [resolvable:$true] %s33
      %39 = dma.hbm_to_vmem [thread:$0]  %s3, 2048, %s34, [#allocation6], 128, 128, 8
    $region17: #{tpu_custom_call.1} parent=1 // pred_fallthru
      _
    // Predicated region
    $region18: #{tpu_custom_call.1} parent=1 // pred_check
      _
    $region19: #{tpu_custom_call.1} parent=1 // pred_check_branch
      %41 = sbr.rel (0) target = $region21
    $region20: #{tpu_custom_call.1} parent=1 // pred_region
      %42 = dma.done [#allocation3], 2048
    $region21: #{tpu_custom_call.1} parent=1 // pred_fallthru
      _
    // Predicated region
    $region22: #{tpu_custom_call.1} parent=1 // pred_check
      _
    $region23: #{tpu_custom_call.1} parent=1 // pred_check_branch
      %44 = sbr.rel (0) target = $region25
    $region24: #{tpu_custom_call.1} parent=1 // pred_region
      %45 = dma.done [#allocation6], 2048
    $region25: #{tpu_custom_call.1} parent=1 // pred_fallthru
      _
    %v46 = vld [vmem:[#allocation2] sm:$0xff]
    %v47 = vld [vmem:[#allocation2 + $0x8] sm:$0xff]
    %v48 = vld [vmem:[#allocation2 + $0x10] sm:$0xff]
    %v49 = vld [vmem:[#allocation2 + $0x18] sm:$0xff]
    %v50 = vld [vmem:[#allocation2 + $0x20] sm:$0xff]
    %v51 = vld [vmem:[#allocation2 + $0x28] sm:$0xff]
    %v52 = vld [vmem:[#allocation2 + $0x30] sm:$0xff]
    %v53 = vld [vmem:[#allocation2 + $0x38] sm:$0xff]
    %v54 = vld [vmem:[#allocation2 + $0x40] sm:$0xff]
    %v55 = vld [vmem:[#allocation2 + $0x48] sm:$0xff]
    %v56 = vld [vmem:[#allocation2 + $0x50] sm:$0xff]
    %v57 = vld [vmem:[#allocation2 + $0x58] sm:$0xff]
    %v58 = vld [vmem:[#allocation2 + $0x60] sm:$0xff]
    %v59 = vld [vmem:[#allocation2 + $0x68] sm:$0xff]
    %v60 = vld [vmem:[#allocation2 + $0x70] sm:$0xff]
    %v61 = vld [vmem:[#allocation2 + $0x78] sm:$0xff]
    %v62 = vld [vmem:[#allocation5] sm:$0xff]
    %v63 = vld [vmem:[#allocation5 + $0x8] sm:$0xff]
    %v64 = vld [vmem:[#allocation5 + $0x10] sm:$0xff]
    %v65 = vld [vmem:[#allocation5 + $0x18] sm:$0xff]
    %v66 = vld [vmem:[#allocation5 + $0x20] sm:$0xff]
    %v67 = vld [vmem:[#allocation5 + $0x28] sm:$0xff]
    %v68 = vld [vmem:[#allocation5 + $0x30] sm:$0xff]
    %v69 = vld [vmem:[#allocation5 + $0x38] sm:$0xff]
    %v70 = vld [vmem:[#allocation5 + $0x40] sm:$0xff]
    %v71 = vld [vmem:[#allocation5 + $0x48] sm:$0xff]
    %v72 = vld [vmem:[#allocation5 + $0x50] sm:$0xff]
    %v73 = vld [vmem:[#allocation5 + $0x58] sm:$0xff]
    %v74 = vld [vmem:[#allocation5 + $0x60] sm:$0xff]
    %v75 = vld [vmem:[#allocation5 + $0x68] sm:$0xff]
    %v76 = vld [vmem:[#allocation5 + $0x70] sm:$0xff]
    %v77 = vld [vmem:[#allocation5 + $0x78] sm:$0xff]
    %78 = vmatprep.subr.mxu0 0.0
    %v79 = vand.u32 %v62, 4294901760
    %80 = vmatpush1.msra.mxu0 %v79
    %81 = vmatprep.subr.mxu0 0.0
    %v82 = vand.u32 %v63, 4294901760
    %83 = vmatpush1.msra.mxu0 %v82
    %84 = vmatprep.subr.mxu0 0.0
    %v85 = vand.u32 %v64, 4294901760
    %86 = vmatpush1.msra.mxu0 %v85
    %87 = vmatprep.subr.mxu0 0.0
    %v88 = vand.u32 %v65, 4294901760
    %89 = vmatpush1.msra.mxu0 %v88
    %90 = vmatprep.subr.mxu0 0.0
    %v91 = vand.u32 %v66, 4294901760
    %92 = vmatpush1.msra.mxu0 %v91
    %93 = vmatprep.subr.mxu0 0.0
    %v94 = vand.u32 %v67, 4294901760
    %95 = vmatpush1.msra.mxu0 %v94
    %96 = vmatprep.subr.mxu0 0.0
    %v97 = vand.u32 %v68, 4294901760
    %98 = vmatpush1.msra.mxu0 %v97
    %99 = vmatprep.subr.mxu0 0.0
    %v100 = vand.u32 %v69, 4294901760
    %101 = vmatpush1.msra.mxu0 %v100
    %102 = vmatprep.subr.mxu0 0.0
    %v103 = vand.u32 %v70, 4294901760
    %104 = vmatpush1.msra.mxu0 %v103
    %105 = vmatprep.subr.mxu0 0.0
    %v106 = vand.u32 %v71, 4294901760
    %107 = vmatpush1.msra.mxu0 %v106
    %108 = vmatprep.subr.mxu0 0.0
    %v109 = vand.u32 %v72, 4294901760
    %110 = vmatpush1.msra.mxu0 %v109
    %111 = vmatprep.subr.mxu0 0.0
    %v112 = vand.u32 %v73, 4294901760
    %113 = vmatpush1.msra.mxu0 %v112
    %114 = vmatprep.subr.mxu0 0.0
    %v115 = vand.u32 %v74, 4294901760
    %116 = vmatpush1.msra.mxu0 %v115
    %117 = vmatprep.subr.mxu0 0.0
    %v118 = vand.u32 %v75, 4294901760
    %119 = vmatpush1.msra.mxu0 %v118
    %120 = vmatprep.subr.mxu0 0.0
    %v121 = vand.u32 %v76, 4294901760
    %122 = vmatpush1.msra.mxu0 %v121
    %123 = vmatprep.subr.mxu0 0.0
    %v124 = vand.u32 %v77, 4294901760
    %125 = vmatpush1.msra.mxu0 %v124
    %126 = vmatprep.subr.mxu0 0.0
    %127 = vmatpush1.msra.mxu0 0.0
    %128 = vmatprep.subr.mxu0 0.0
    %129 = vmatpush1.msra.mxu0 0.0
    %130 = vmatprep.subr.mxu0 0.0
    %131 = vmatpush1.msra.mxu0 0.0
    %132 = vmatprep.subr.mxu0 0.0
    %133 = vmatpush1.msra.mxu0 0.0
    %134 = vmatprep.subr.mxu0 0.0
    %135 = vmatpush1.msra.mxu0 0.0
    %136 = vmatprep.subr.mxu0 0.0
    %137 = vmatpush1.msra.mxu0 0.0
    %138 = vmatprep.subr.mxu0 0.0
    %139 = vmatpush1.msra.mxu0 0.0
    %140 = vmatprep.subr.mxu0 0.0
    %141 = vmatpush1.msra.mxu0 0.0
    %142 = vmatprep.subr.mxu0 0.0
    %143 = vmatpush1.msra.mxu0 0.0
    %144 = vmatprep.subr.mxu0 0.0
    %145 = vmatpush1.msra.mxu0 0.0
    %146 = vmatprep.subr.mxu0 0.0
    %147 = vmatpush1.msra.mxu0 0.0
    %148 = vmatprep.subr.mxu0 0.0
    %149 = vmatpush1.msra.mxu0 0.0
    %150 = vmatprep.subr.mxu0 0.0
    %151 = vmatpush1.msra.mxu0 0.0
    %152 = vmatprep.subr.mxu0 0.0
    %153 = vmatpush1.msra.mxu0 0.0
    %154 = vmatprep.subr.mxu0 0.0
    %155 = vmatpush1.msra.mxu0 0.0
    %156 = vmatprep.subr.mxu0 0.0
    %157 = vmatpush1.msra.mxu0 0.0
    %158 = vmatprep.mubr.f32.mxu0 0.0
    %v159 = vand.u32 %v46, 4294901760
    %v160 = vsub.f32 %v46, %v159
    %v161 = vand.u32 %v160, 4294901760
    %v162 = vsub.f32 %v160, %v161
    %v163 = vand.u32 %v162, 4294901760
    %164 = vmatmul.mubr.f32.gmra.mrb[0].mxu0 %v163
    %v165 = vpop.f32.mrb[0].mxu0
    %v166 = vadd.f32 0.0, %v165
    %v167 = vpop.f32.mrb[0].mxu0
    %168 = vmatprep.mubr.f32.mxu0 0.0
    %v169 = vand.u32 %v47, 4294901760
    %v170 = vsub.f32 %v47, %v169
    %v171 = vand.u32 %v170, 4294901760
    %v172 = vsub.f32 %v170, %v171
    %v173 = vand.u32 %v172, 4294901760
    %174 = vmatmul.mubr.f32.gmra.mrb[0].mxu0 %v173
    %v175 = vpop.f32.mrb[0].mxu0
    %v176 = vadd.f32 0.0, %v175
    %v177 = vpop.f32.mrb[0].mxu0
    %178 = vmatprep.mubr.f32.mxu0 0.0
    %v179 = vand.u32 %v48, 4294901760
    %v180 = vsub.f32 %v48, %v179
    %v181 = vand.u32 %v180, 4294901760
    %v182 = vsub.f32 %v180, %v181
    %v183 = vand.u32 %v182, 4294901760
    %184 = vmatmul.mubr.f32.gmra.mrb[0].mxu0 %v183
    %v185 = vpop.f32.mrb[0].mxu0
    %v186 = vadd.f32 0.0, %v185
    %v187 = vpop.f32.mrb[0].mxu0
    %188 = vmatprep.mubr.f32.mxu0 0.0
    %v189 = vand.u32 %v49, 4294901760
    %v190 = vsub.f32 %v49, %v189
    %v191 = vand.u32 %v190, 4294901760
    %v192 = vsub.f32 %v190, %v191
    %v193 = vand.u32 %v192, 4294901760
    %194 = vmatmul.mubr.f32.gmra.mrb[0].mxu0 %v193
    %v195 = vpop.f32.mrb[0].mxu0
    %v196 = vadd.f32 0.0, %v195
    %v197 = vpop.f32.mrb[0].mxu0
    %198 = vmatprep.mubr.f32.mxu0 0.0
    %v199 = vand.u32 %v50, 4294901760
    %v200 = vsub.f32 %v50, %v199
    %v201 = vand.u32 %v200, 4294901760
    %v202 = vsub.f32 %v200, %v201
    %v203 = vand.u32 %v202, 4294901760
    %204 = vmatmul.mubr.f32.gmra.mrb[0].mxu0 %v203
    %v205 = vpop.f32.mrb[0].mxu0
    %v206 = vadd.f32 0.0, %v205
    %v207 = vpop.f32.mrb[0].mxu0
    %208 = vmatprep.mubr.f32.mxu0 0.0
    %v209 = vand.u32 %v51, 4294901760
    %v210 = vsub.f32 %v51, %v209
    %v211 = vand.u32 %v210, 4294901760
    %v212 = vsub.f32 %v210, %v211
    %v213 = vand.u32 %v212, 4294901760
    %214 = vmatmul.mubr.f32.gmra.mrb[0].mxu0 %v213
    %v215 = vpop.f32.mrb[0].mxu0
    %v216 = vadd.f32 0.0, %v215
    %v217 = vpop.f32.mrb[0].mxu0
    %218 = vmatprep.mubr.f32.mxu0 0.0
    %v219 = vand.u32 %v52, 4294901760
    %v220 = vsub.f32 %v52, %v219
    %v221 = vand.u32 %v220, 4294901760
    %v222 = vsub.f32 %v220, %v221
    %v223 = vand.u32 %v222, 4294901760
    %224 = vmatmul.mubr.f32.gmra.mrb[0].mxu0 %v223
    %v225 = vpop.f32.mrb[0].mxu0
    %v226 = vadd.f32 0.0, %v225
    %v227 = vpop.f32.mrb[0].mxu0
    %228 = vmatprep.mubr.f32.mxu0 0.0
    %v229 = vand.u32 %v53, 4294901760
    %v230 = vsub.f32 %v53, %v229
    %v231 = vand.u32 %v230, 4294901760
    %v232 = vsub.f32 %v230, %v231
    %v233 = vand.u32 %v232, 4294901760
    %234 = vmatmul.mubr.f32.gmra.mrb[0].mxu0 %v233
    %v235 = vpop.f32.mrb[0].mxu0
    %v236 = vadd.f32 0.0, %v235
    %v237 = vpop.f32.mrb[0].mxu0
    %238 = vmatprep.mubr.f32.mxu0 0.0
    %v239 = vand.u32 %v54, 4294901760
    %v240 = vsub.f32 %v54, %v239
    %v241 = vand.u32 %v240, 4294901760
    %v242 = vsub.f32 %v240, %v241
    %v243 = vand.u32 %v242, 4294901760
    %244 = vmatmul.mubr.f32.gmra.mrb[0].mxu0 %v243
    %v245 = vpop.f32.mrb[0].mxu0
    %v246 = vadd.f32 0.0, %v245
    %v247 = vpop.f32.mrb[0].mxu0
    %248 = vmatprep.mubr.f32.mxu0 0.0
    %v249 = vand.u32 %v55, 4294901760
    %v250 = vsub.f32 %v55, %v249
    %v251 = vand.u32 %v250, 4294901760
    %v252 = vsub.f32 %v250, %v251
    %v253 = vand.u32 %v252, 4294901760
    %254 = vmatmul.mubr.f32.gmra.mrb[0].mxu0 %v253
    %v255 = vpop.f32.mrb[0].mxu0
    %v256 = vadd.f32 0.0, %v255
    %v257 = vpop.f32.mrb[0].mxu0
    %258 = vmatprep.mubr.f32.mxu0 0.0
    %v259 = vand.u32 %v56, 4294901760
    %v260 = vsub.f32 %v56, %v259
    %v261 = vand.u32 %v260, 4294901760
    %v262 = vsub.f32 %v260, %v261
    %v263 = vand.u32 %v262, 4294901760
    %264 = vmatmul.mubr.f32.gmra.mrb[0].mxu0 %v263
    %v265 = vpop.f32.mrb[0].mxu0
    %v266 = vadd.f32 0.0, %v265
    %v267 = vpop.f32.mrb[0].mxu0
    %268 = vmatprep.mubr.f32.mxu0 0.0
    %v269 = vand.u32 %v57, 4294901760
    %v270 = vsub.f32 %v57, %v269
    %v271 = vand.u32 %v270, 4294901760
    %v272 = vsub.f32 %v270, %v271
    %v273 = vand.u32 %v272, 4294901760
    %274 = vmatmul.mubr.f32.gmra.mrb[0].mxu0 %v273
    %v275 = vpop.f32.mrb[0].mxu0
    %v276 = vadd.f32 0.0, %v275
    %v277 = vpop.f32.mrb[0].mxu0
    %278 = vmatprep.mubr.f32.mxu0 0.0
    %v279 = vand.u32 %v58, 4294901760
    %v280 = vsub.f32 %v58, %v279
    %v281 = vand.u32 %v280, 4294901760
    %v282 = vsub.f32 %v280, %v281
    %v283 = vand.u32 %v282, 4294901760
    %284 = vmatmul.mubr.f32.gmra.mrb[0].mxu0 %v283
    %v285 = vpop.f32.mrb[0].mxu0
    %v286 = vadd.f32 0.0, %v285
    %v287 = vpop.f32.mrb[0].mxu0
    %288 = vmatprep.mubr.f32.mxu0 0.0
    %v289 = vand.u32 %v59, 4294901760
    %v290 = vsub.f32 %v59, %v289
    %v291 = vand.u32 %v290, 4294901760
    %v292 = vsub.f32 %v290, %v291
    %v293 = vand.u32 %v292, 4294901760
    %294 = vmatmul.mubr.f32.gmra.mrb[0].mxu0 %v293
    %v295 = vpop.f32.mrb[0].mxu0
    %v296 = vadd.f32 0.0, %v295
    %v297 = vpop.f32.mrb[0].mxu0
    %298 = vmatprep.mubr.f32.mxu0 0.0
    %v299 = vand.u32 %v60, 4294901760
    %v300 = vsub.f32 %v60, %v299
    %v301 = vand.u32 %v300, 4294901760
    %v302 = vsub.f32 %v300, %v301
    %v303 = vand.u32 %v302, 4294901760
    %304 = vmatmul.mubr.f32.gmra.mrb[0].mxu0 %v303
    %v305 = vpop.f32.mrb[0].mxu0
    %v306 = vadd.f32 0.0, %v305
    %v307 = vpop.f32.mrb[0].mxu0
    %308 = vmatprep.mubr.f32.mxu0 0.0
    %v309 = vand.u32 %v61, 4294901760
    %v310 = vsub.f32 %v61, %v309
    %v311 = vand.u32 %v310, 4294901760
    %v312 = vsub.f32 %v310, %v311
    %v313 = vand.u32 %v312, 4294901760
    %314 = vmatmul.mubr.f32.gmra.mrb[0].mxu0 %v313
    %v315 = vpop.f32.mrb[0].mxu0
    %v316 = vadd.f32 0.0, %v315
    %v317 = vpop.f32.mrb[0].mxu0
    %318 = vdwg.mxu0
    %319 = vmatprep.subr.mxu0 0.0
    %v320 = vand.u32 %v62, 4294901760
    %v321 = vsub.f32 %v62, %v320
    %v322 = vand.u32 %v321, 4294901760
    %v323 = vsub.f32 %v321, %v322
    %v324 = vand.u32 %v323, 4294901760
    %325 = vmatpush1.msra.mxu0 %v324
    %326 = vmatprep.subr.mxu0 0.0
    %v327 = vand.u32 %v63, 4294901760
    %v328 = vsub.f32 %v63, %v327
    %v329 = vand.u32 %v328, 4294901760
    %v330 = vsub.f32 %v328, %v329
    %v331 = vand.u32 %v330, 4294901760
    %332 = vmatpush1.msra.mxu0 %v331
    %333 = vmatprep.subr.mxu0 0.0
    %v334 = vand.u32 %v64, 4294901760
    %v335 = vsub.f32 %v64, %v334
    %v336 = vand.u32 %v335, 4294901760
    %v337 = vsub.f32 %v335, %v336
    %v338 = vand.u32 %v337, 4294901760
    %339 = vmatpush1.msra.mxu0 %v338
    %340 = vmatprep.subr.mxu0 0.0
    %v341 = vand.u32 %v65, 4294901760
    %v342 = vsub.f32 %v65, %v341
    %v343 = vand.u32 %v342, 4294901760
    %v344 = vsub.f32 %v342, %v343
    %v345 = vand.u32 %v344, 4294901760
    %346 = vmatpush1.msra.mxu0 %v345
    %347 = vmatprep.subr.mxu0 0.0
    %v348 = vand.u32 %v66, 4294901760
    %v349 = vsub.f32 %v66, %v348
    %v350 = vand.u32 %v349, 4294901760
    %v351 = vsub.f32 %v349, %v350
    %v352 = vand.u32 %v351, 4294901760
    %353 = vmatpush1.msra.mxu0 %v352
    %354 = vmatprep.subr.mxu0 0.0
    %v355 = vand.u32 %v67, 4294901760
    %v356 = vsub.f32 %v67, %v355
    %v357 = vand.u32 %v356, 4294901760
    %v358 = vsub.f32 %v356, %v357
    %v359 = vand.u32 %v358, 4294901760
    %360 = vmatpush1.msra.mxu0 %v359
    %361 = vmatprep.subr.mxu0 0.0
    %v362 = vand.u32 %v68, 4294901760
    %v363 = vsub.f32 %v68, %v362
    %v364 = vand.u32 %v363, 4294901760
    %v365 = vsub.f32 %v363, %v364
    %v366 = vand.u32 %v365, 4294901760
    %367 = vmatpush1.msra.mxu0 %v366
    %368 = vmatprep.subr.mxu0 0.0
    %v369 = vand.u32 %v69, 4294901760
    %v370 = vsub.f32 %v69, %v369
    %v371 = vand.u32 %v370, 4294901760
    %v372 = vsub.f32 %v370, %v371
    %v373 = vand.u32 %v372, 4294901760
    %374 = vmatpush1.msra.mxu0 %v373
    %375 = vmatprep.subr.mxu0 0.0
    %v376 = vand.u32 %v70, 4294901760
    %v377 = vsub.f32 %v70, %v376
    %v378 = vand.u32 %v377, 4294901760
    %v379 = vsub.f32 %v377, %v378
    %v380 = vand.u32 %v379, 4294901760
    %381 = vmatpush1.msra.mxu0 %v380
    %382 = vmatprep.subr.mxu0 0.0
    %v383 = vand.u32 %v71, 4294901760
    %v384 = vsub.f32 %v71, %v383
    %v385 = vand.u32 %v384, 4294901760
    %v386 = vsub.f32 %v384, %v385
    %v387 = vand.u32 %v386, 4294901760
    %388 = vmatpush1.msra.mxu0 %v387
    %389 = vmatprep.subr.mxu0 0.0
    %v390 = vand.u32 %v72, 4294901760
    %v391 = vsub.f32 %v72, %v390
    %v392 = vand.u32 %v391, 4294901760
    %v393 = vsub.f32 %v391, %v392
    %v394 = vand.u32 %v393, 4294901760
    %395 = vmatpush1.msra.mxu0 %v394
    %396 = vmatprep.subr.mxu0 0.0
    %v397 = vand.u32 %v73, 4294901760
    %v398 = vsub.f32 %v73, %v397
    %v399 = vand.u32 %v398, 4294901760
    %v400 = vsub.f32 %v398, %v399
    %v401 = vand.u32 %v400, 4294901760
    %402 = vmatpush1.msra.mxu0 %v401
    %403 = vmatprep.subr.mxu0 0.0
    %v404 = vand.u32 %v74, 4294901760
    %v405 = vsub.f32 %v74, %v404
    %v406 = vand.u32 %v405, 4294901760
    %v407 = vsub.f32 %v405, %v406
    %v408 = vand.u32 %v407, 4294901760
    %409 = vmatpush1.msra.mxu0 %v408
    %410 = vmatprep.subr.mxu0 0.0
    %v411 = vand.u32 %v75, 4294901760
    %v412 = vsub.f32 %v75, %v411
    %v413 = vand.u32 %v412, 4294901760
    %v414 = vsub.f32 %v412, %v413
    %v415 = vand.u32 %v414, 4294901760
    %416 = vmatpush1.msra.mxu0 %v415
    %417 = vmatprep.subr.mxu0 0.0
    %v418 = vand.u32 %v76, 4294901760
    %v419 = vsub.f32 %v76, %v418
    %v420 = vand.u32 %v419, 4294901760
    %v421 = vsub.f32 %v419, %v420
    %v422 = vand.u32 %v421, 4294901760
    %423 = vmatpush1.msra.mxu0 %v422
    %424 = vmatprep.subr.mxu0 0.0
    %v425 = vand.u32 %v77, 4294901760
    %v426 = vsub.f32 %v77, %v425
    %v427 = vand.u32 %v426, 4294901760
    %v428 = vsub.f32 %v426, %v427
    %v429 = vand.u32 %v428, 4294901760
    %430 = vmatpush1.msra.mxu0 %v429
    %431 = vmatprep.subr.mxu0 0.0
    %432 = vmatpush1.msra.mxu0 0.0
    %433 = vmatprep.subr.mxu0 0.0
    %434 = vmatpush1.msra.mxu0 0.0
    %435 = vmatprep.subr.mxu0 0.0
    %436 = vmatpush1.msra.mxu0 0.0
    %437 = vmatprep.subr.mxu0 0.0
    %438 = vmatpush1.msra.mxu0 0.0
    %439 = vmatprep.subr.mxu0 0.0
    %440 = vmatpush1.msra.mxu0 0.0
    %441 = vmatprep.subr.mxu0 0.0
    %442 = vmatpush1.msra.mxu0 0.0
    %443 = vmatprep.subr.mxu0 0.0
    %444 = vmatpush1.msra.mxu0 0.0
    %445 = vmatprep.subr.mxu0 0.0
    %446 = vmatpush1.msra.mxu0 0.0
    %447 = vmatprep.subr.mxu0 0.0
    %448 = vmatpush1.msra.mxu0 0.0
    %449 = vmatprep.subr.mxu0 0.0
    %450 = vmatpush1.msra.mxu0 0.0
    %451 = vmatprep.subr.mxu0 0.0
    %452 = vmatpush1.msra.mxu0 0.0
    %453 = vmatprep.subr.mxu0 0.0
    %454 = vmatpush1.msra.mxu0 0.0
    %455 = vmatprep.subr.mxu0 0.0
    %456 = vmatpush1.msra.mxu0 0.0
    %457 = vmatprep.subr.mxu0 0.0
    %458 = vmatpush1.msra.mxu0 0.0
    %459 = vmatprep.subr.mxu0 0.0
    %460 = vmatpush1.msra.mxu0 0.0
    %461 = vmatprep.subr.mxu0 0.0
    %462 = vmatpush1.msra.mxu0 0.0
    %463 = vmatprep.mubr.f32.mxu0 0.0
    %v464 = vand.u32 %v46, 4294901760
    %465 = vmatmul.mubr.f32.gmra.mrb[0].mxu0 %v464
    %v466 = vpop.f32.mrb[0].mxu0
    %v467 = vadd.f32 %v166, %v466
    %v468 = vpop.f32.mrb[0].mxu0
    %469 = vmatprep.mubr.f32.mxu0 0.0
    %v470 = vand.u32 %v47, 4294901760
    %471 = vmatmul.mubr.f32.gmra.mrb[0].mxu0 %v470
    %v472 = vpop.f32.mrb[0].mxu0
    %v473 = vadd.f32 %v176, %v472
    %v474 = vpop.f32.mrb[0].mxu0
    %475 = vmatprep.mubr.f32.mxu0 0.0
    %v476 = vand.u32 %v48, 4294901760
    %477 = vmatmul.mubr.f32.gmra.mrb[0].mxu0 %v476
    %v478 = vpop.f32.mrb[0].mxu0
    %v479 = vadd.f32 %v186, %v478
    %v480 = vpop.f32.mrb[0].mxu0
    %481 = vmatprep.mubr.f32.mxu0 0.0
    %v482 = vand.u32 %v49, 4294901760
    %483 = vmatmul.mubr.f32.gmra.mrb[0].mxu0 %v482
    %v484 = vpop.f32.mrb[0].mxu0
    %v485 = vadd.f32 %v196, %v484
    %v486 = vpop.f32.mrb[0].mxu0
    %487 = vmatprep.mubr.f32.mxu0 0.0
    %v488 = vand.u32 %v50, 4294901760
    %489 = vmatmul.mubr.f32.gmra.mrb[0].mxu0 %v488
    %v490 = vpop.f32.mrb[0].mxu0
    %v491 = vadd.f32 %v206, %v490
    %v492 = vpop.f32.mrb[0].mxu0
    %493 = vmatprep.mubr.f32.mxu0 0.0
    %v494 = vand.u32 %v51, 4294901760
    %495 = vmatmul.mubr.f32.gmra.mrb[0].mxu0 %v494
    %v496 = vpop.f32.mrb[0].mxu0
    %v497 = vadd.f32 %v216, %v496
    %v498 = vpop.f32.mrb[0].mxu0
    %499 = vmatprep.mubr.f32.mxu0 0.0
    %v500 = vand.u32 %v52, 4294901760
    %501 = vmatmul.mubr.f32.gmra.mrb[0].mxu0 %v500
    %v502 = vpop.f32.mrb[0].mxu0
    %v503 = vadd.f32 %v226, %v502
    %v504 = vpop.f32.mrb[0].mxu0
    %505 = vmatprep.mubr.f32.mxu0 0.0
    %v506 = vand.u32 %v53, 4294901760
    %507 = vmatmul.mubr.f32.gmra.mrb[0].mxu0 %v506
    %v508 = vpop.f32.mrb[0].mxu0
    %v509 = vadd.f32 %v236, %v508
    %v510 = vpop.f32.mrb[0].mxu0
    %511 = vmatprep.mubr.f32.mxu0 0.0
    %v512 = vand.u32 %v54, 4294901760
    %513 = vmatmul.mubr.f32.gmra.mrb[0].mxu0 %v512
    %v514 = vpop.f32.mrb[0].mxu0
    %v515 = vadd.f32 %v246, %v514
    %v516 = vpop.f32.mrb[0].mxu0
    %517 = vmatprep.mubr.f32.mxu0 0.0
    %v518 = vand.u32 %v55, 4294901760
    %519 = vmatmul.mubr.f32.gmra.mrb[0].mxu0 %v518
    %v520 = vpop.f32.mrb[0].mxu0
    %v521 = vadd.f32 %v256, %v520
    %v522 = vpop.f32.mrb[0].mxu0
    %523 = vmatprep.mubr.f32.mxu0 0.0
    %v524 = vand.u32 %v56, 4294901760
    %525 = vmatmul.mubr.f32.gmra.mrb[0].mxu0 %v524
    %v526 = vpop.f32.mrb[0].mxu0
    %v527 = vadd.f32 %v266, %v526
    %v528 = vpop.f32.mrb[0].mxu0
    %529 = vmatprep.mubr.f32.mxu0 0.0
    %v530 = vand.u32 %v57, 4294901760
    %531 = vmatmul.mubr.f32.gmra.mrb[0].mxu0 %v530
    %v532 = vpop.f32.mrb[0].mxu0
    %v533 = vadd.f32 %v276, %v532
    %v534 = vpop.f32.mrb[0].mxu0
    %535 = vmatprep.mubr.f32.mxu0 0.0
    %v536 = vand.u32 %v58, 4294901760
    %537 = vmatmul.mubr.f32.gmra.mrb[0].mxu0 %v536
    %v538 = vpop.f32.mrb[0].mxu0
    %v539 = vadd.f32 %v286, %v538
    %v540 = vpop.f32.mrb[0].mxu0
    %541 = vmatprep.mubr.f32.mxu0 0.0
    %v542 = vand.u32 %v59, 4294901760
    %543 = vmatmul.mubr.f32.gmra.mrb[0].mxu0 %v542
    %v544 = vpop.f32.mrb[0].mxu0
    %v545 = vadd.f32 %v296, %v544
    %v546 = vpop.f32.mrb[0].mxu0
    %547 = vmatprep.mubr.f32.mxu0 0.0
    %v548 = vand.u32 %v60, 4294901760
    %549 = vmatmul.mubr.f32.gmra.mrb[0].mxu0 %v548
    %v550 = vpop.f32.mrb[0].mxu0
    %v551 = vadd.f32 %v306, %v550
    %v552 = vpop.f32.mrb[0].mxu0
    %553 = vmatprep.mubr.f32.mxu0 0.0
    %v554 = vand.u32 %v61, 4294901760
    %555 = vmatmul.mubr.f32.gmra.mrb[0].mxu0 %v554
    %v556 = vpop.f32.mrb[0].mxu0
    %v557 = vadd.f32 %v316, %v556
    %v558 = vpop.f32.mrb[0].mxu0
    %559 = vdwg.mxu0
    %560 = vmatprep.subr.mxu0 0.0
    %v561 = vand.u32 %v62, 4294901760
    %v562 = vsub.f32 %v62, %v561
    %563 = vmatpush1.msra.mxu0 %v562
    %564 = vmatprep.subr.mxu0 0.0
    %v565 = vand.u32 %v63, 4294901760
    %v566 = vsub.f32 %v63, %v565
    %567 = vmatpush1.msra.mxu0 %v566
    %568 = vmatprep.subr.mxu0 0.0
    %v569 = vand.u32 %v64, 4294901760
    %v570 = vsub.f32 %v64, %v569
    %571 = vmatpush1.msra.mxu0 %v570
    %572 = vmatprep.subr.mxu0 0.0
    %v573 = vand.u32 %v65, 4294901760
    %v574 = vsub.f32 %v65, %v573
    %575 = vmatpush1.msra.mxu0 %v574
    %576 = vmatprep.subr.mxu0 0.0
    %v577 = vand.u32 %v66, 4294901760
    %v578 = vsub.f32 %v66, %v577
    %579 = vmatpush1.msra.mxu0 %v578
    %580 = vmatprep.subr.mxu0 0.0
    %v581 = vand.u32 %v67, 4294901760
    %v582 = vsub.f32 %v67, %v581
    %583 = vmatpush1.msra.mxu0 %v582
    %584 = vmatprep.subr.mxu0 0.0
    %v585 = vand.u32 %v68, 4294901760
    %v586 = vsub.f32 %v68, %v585
    %587 = vmatpush1.msra.mxu0 %v586
    %588 = vmatprep.subr.mxu0 0.0
    %v589 = vand.u32 %v69, 4294901760
    %v590 = vsub.f32 %v69, %v589
    %591 = vmatpush1.msra.mxu0 %v590
    %592 = vmatprep.subr.mxu0 0.0
    %v593 = vand.u32 %v70, 4294901760
    %v594 = vsub.f32 %v70, %v593
    %595 = vmatpush1.msra.mxu0 %v594
    %596 = vmatprep.subr.mxu0 0.0
    %v597 = vand.u32 %v71, 4294901760
    %v598 = vsub.f32 %v71, %v597
    %599 = vmatpush1.msra.mxu0 %v598
    %600 = vmatprep.subr.mxu0 0.0
    %v601 = vand.u32 %v72, 4294901760
    %v602 = vsub.f32 %v72, %v601
    %603 = vmatpush1.msra.mxu0 %v602
    %604 = vmatprep.subr.mxu0 0.0
    %v605 = vand.u32 %v73, 4294901760
    %v606 = vsub.f32 %v73, %v605
    %607 = vmatpush1.msra.mxu0 %v606
    %608 = vmatprep.subr.mxu0 0.0
    %v609 = vand.u32 %v74, 4294901760
    %v610 = vsub.f32 %v74, %v609
    %611 = vmatpush1.msra.mxu0 %v610
    %612 = vmatprep.subr.mxu0 0.0
    %v613 = vand.u32 %v75, 4294901760
    %v614 = vsub.f32 %v75, %v613
    %615 = vmatpush1.msra.mxu0 %v614
    %616 = vmatprep.subr.mxu0 0.0
    %v617 = vand.u32 %v76, 4294901760
    %v618 = vsub.f32 %v76, %v617
    %619 = vmatpush1.msra.mxu0 %v618
    %620 = vmatprep.subr.mxu0 0.0
    %v621 = vand.u32 %v77, 4294901760
    %v622 = vsub.f32 %v77, %v621
    %623 = vmatpush1.msra.mxu0 %v622
    %624 = vmatprep.subr.mxu0 0.0
    %625 = vmatpush1.msra.mxu0 0.0
    %626 = vmatprep.subr.mxu0 0.0
    %627 = vmatpush1.msra.mxu0 0.0
    %628 = vmatprep.subr.mxu0 0.0
    %629 = vmatpush1.msra.mxu0 0.0
    %630 = vmatprep.subr.mxu0 0.0
    %631 = vmatpush1.msra.mxu0 0.0
    %632 = vmatprep.subr.mxu0 0.0
    %633 = vmatpush1.msra.mxu0 0.0
    %634 = vmatprep.subr.mxu0 0.0
    %635 = vmatpush1.msra.mxu0 0.0
    %636 = vmatprep.subr.mxu0 0.0
    %637 = vmatpush1.msra.mxu0 0.0
    %638 = vmatprep.subr.mxu0 0.0
    %639 = vmatpush1.msra.mxu0 0.0
    %640 = vmatprep.subr.mxu0 0.0
    %641 = vmatpush1.msra.mxu0 0.0
    %642 = vmatprep.subr.mxu0 0.0
    %643 = vmatpush1.msra.mxu0 0.0
    %644 = vmatprep.subr.mxu0 0.0
    %645 = vmatpush1.msra.mxu0 0.0
    %646 = vmatprep.subr.mxu0 0.0
    %647 = vmatpush1.msra.mxu0 0.0
    %648 = vmatprep.subr.mxu0 0.0
    %649 = vmatpush1.msra.mxu0 0.0
    %650 = vmatprep.subr.mxu0 0.0
    %651 = vmatpush1.msra.mxu0 0.0
    %652 = vmatprep.subr.mxu0 0.0
    %653 = vmatpush1.msra.mxu0 0.0
    %654 = vmatprep.subr.mxu0 0.0
    %655 = vmatpush1.msra.mxu0 0.0
    %656 = vmatprep.mubr.f32.mxu0 0.0
    %v657 = vand.u32 %v46, 4294901760
    %v658 = vsub.f32 %v46, %v657
    %659 = vmatmul.mubr.f32.gmra.mrb[0].mxu0 %v658
    %v660 = vpop.f32.mrb[0].mxu0
    %v661 = vadd.f32 %v467, %v660
    %v662 = vpop.f32.mrb[0].mxu0
    %663 = vmatprep.mubr.f32.mxu0 0.0
    %v664 = vand.u32 %v47, 4294901760
    %v665 = vsub.f32 %v47, %v664
    %666 = vmatmul.mubr.f32.gmra.mrb[0].mxu0 %v665
    %v667 = vpop.f32.mrb[0].mxu0
    %v668 = vadd.f32 %v473, %v667
    %v669 = vpop.f32.mrb[0].mxu0
    %670 = vmatprep.mubr.f32.mxu0 0.0
    %v671 = vand.u32 %v48, 4294901760
    %v672 = vsub.f32 %v48, %v671
    %673 = vmatmul.mubr.f32.gmra.mrb[0].mxu0 %v672
    %v674 = vpop.f32.mrb[0].mxu0
    %v675 = vadd.f32 %v479, %v674
    %v676 = vpop.f32.mrb[0].mxu0
    %677 = vmatprep.mubr.f32.mxu0 0.0
    %v678 = vand.u32 %v49, 4294901760
    %v679 = vsub.f32 %v49, %v678
    %680 = vmatmul.mubr.f32.gmra.mrb[0].mxu0 %v679
    %v681 = vpop.f32.mrb[0].mxu0
    %v682 = vadd.f32 %v485, %v681
    %v683 = vpop.f32.mrb[0].mxu0
    %684 = vmatprep.mubr.f32.mxu0 0.0
    %v685 = vand.u32 %v50, 4294901760
    %v686 = vsub.f32 %v50, %v685
    %687 = vmatmul.mubr.f32.gmra.mrb[0].mxu0 %v686
    %v688 = vpop.f32.mrb[0].mxu0
    %v689 = vadd.f32 %v491, %v688
    %v690 = vpop.f32.mrb[0].mxu0
    %691 = vmatprep.mubr.f32.mxu0 0.0
    %v692 = vand.u32 %v51, 4294901760
    %v693 = vsub.f32 %v51, %v692
    %694 = vmatmul.mubr.f32.gmra.mrb[0].mxu0 %v693
    %v695 = vpop.f32.mrb[0].mxu0
    %v696 = vadd.f32 %v497, %v695
    %v697 = vpop.f32.mrb[0].mxu0
    %698 = vmatprep.mubr.f32.mxu0 0.0
    %v699 = vand.u32 %v52, 4294901760
    %v700 = vsub.f32 %v52, %v699
    %701 = vmatmul.mubr.f32.gmra.mrb[0].mxu0 %v700
    %v702 = vpop.f32.mrb[0].mxu0
    %v703 = vadd.f32 %v503, %v702
    %v704 = vpop.f32.mrb[0].mxu0
    %705 = vmatprep.mubr.f32.mxu0 0.0
    %v706 = vand.u32 %v53, 4294901760
    %v707 = vsub.f32 %v53, %v706
    %708 = vmatmul.mubr.f32.gmra.mrb[0].mxu0 %v707
    %v709 = vpop.f32.mrb[0].mxu0
    %v710 = vadd.f32 %v509, %v709
    %v711 = vpop.f32.mrb[0].mxu0
    %712 = vmatprep.mubr.f32.mxu0 0.0
    %v713 = vand.u32 %v54, 4294901760
    %v714 = vsub.f32 %v54, %v713
    %715 = vmatmul.mubr.f32.gmra.mrb[0].mxu0 %v714
    %v716 = vpop.f32.mrb[0].mxu0
    %v717 = vadd.f32 %v515, %v716
    %v718 = vpop.f32.mrb[0].mxu0
    %719 = vmatprep.mubr.f32.mxu0 0.0
    %v720 = vand.u32 %v55, 4294901760
    %v721 = vsub.f32 %v55, %v720
    %722 = vmatmul.mubr.f32.gmra.mrb[0].mxu0 %v721
    %v723 = vpop.f32.mrb[0].mxu0
    %v724 = vadd.f32 %v521, %v723
    %v725 = vpop.f32.mrb[0].mxu0
    %726 = vmatprep.mubr.f32.mxu0 0.0
    %v727 = vand.u32 %v56, 4294901760
    %v728 = vsub.f32 %v56, %v727
    %729 = vmatmul.mubr.f32.gmra.mrb[0].mxu0 %v728
    %v730 = vpop.f32.mrb[0].mxu0
    %v731 = vadd.f32 %v527, %v730
    %v732 = vpop.f32.mrb[0].mxu0
    %733 = vmatprep.mubr.f32.mxu0 0.0
    %v734 = vand.u32 %v57, 4294901760
    %v735 = vsub.f32 %v57, %v734
    %736 = vmatmul.mubr.f32.gmra.mrb[0].mxu0 %v735
    %v737 = vpop.f32.mrb[0].mxu0
    %v738 = vadd.f32 %v533, %v737
    %v739 = vpop.f32.mrb[0].mxu0
    %740 = vmatprep.mubr.f32.mxu0 0.0
    %v741 = vand.u32 %v58, 4294901760
    %v742 = vsub.f32 %v58, %v741
    %743 = vmatmul.mubr.f32.gmra.mrb[0].mxu0 %v742
    %v744 = vpop.f32.mrb[0].mxu0
    %v745 = vadd.f32 %v539, %v744
    %v746 = vpop.f32.mrb[0].mxu0
    %747 = vmatprep.mubr.f32.mxu0 0.0
    %v748 = vand.u32 %v59, 4294901760
    %v749 = vsub.f32 %v59, %v748
    %750 = vmatmul.mubr.f32.gmra.mrb[0].mxu0 %v749
    %v751 = vpop.f32.mrb[0].mxu0
    %v752 = vadd.f32 %v545, %v751
    %v753 = vpop.f32.mrb[0].mxu0
    %754 = vmatprep.mubr.f32.mxu0 0.0
    %v755 = vand.u32 %v60, 4294901760
    %v756 = vsub.f32 %v60, %v755
    %757 = vmatmul.mubr.f32.gmra.mrb[0].mxu0 %v756
    %v758 = vpop.f32.mrb[0].mxu0
    %v759 = vadd.f32 %v551, %v758
    %v760 = vpop.f32.mrb[0].mxu0
    %761 = vmatprep.mubr.f32.mxu0 0.0
    %v762 = vand.u32 %v61, 4294901760
    %v763 = vsub.f32 %v61, %v762
    %764 = vmatmul.mubr.f32.gmra.mrb[0].mxu0 %v763
    %v765 = vpop.f32.mrb[0].mxu0
    %v766 = vadd.f32 %v557, %v765
    %v767 = vpop.f32.mrb[0].mxu0
    %768 = vdwg.mxu0
    %769 = vmatprep.subr.mxu0 0.0
    %v770 = vand.u32 %v62, 4294901760
    %771 = vmatpush1.msra.mxu0 %v770
    %772 = vmatprep.subr.mxu0 0.0
    %v773 = vand.u32 %v63, 4294901760
    %774 = vmatpush1.msra.mxu0 %v773
    %775 = vmatprep.subr.mxu0 0.0
    %v776 = vand.u32 %v64, 4294901760
    %777 = vmatpush1.msra.mxu0 %v776
    %778 = vmatprep.subr.mxu0 0.0
    %v779 = vand.u32 %v65, 4294901760
    %780 = vmatpush1.msra.mxu0 %v779
    %781 = vmatprep.subr.mxu0 0.0
    %v782 = vand.u32 %v66, 4294901760
    %783 = vmatpush1.msra.mxu0 %v782
    %784 = vmatprep.subr.mxu0 0.0
    %v785 = vand.u32 %v67, 4294901760
    %786 = vmatpush1.msra.mxu0 %v785
    %787 = vmatprep.subr.mxu0 0.0
    %v788 = vand.u32 %v68, 4294901760
    %789 = vmatpush1.msra.mxu0 %v788
    %790 = vmatprep.subr.mxu0 0.0
    %v791 = vand.u32 %v69, 4294901760
    %792 = vmatpush1.msra.mxu0 %v791
    %793 = vmatprep.subr.mxu0 0.0
    %v794 = vand.u32 %v70, 4294901760
    %795 = vmatpush1.msra.mxu0 %v794
    %796 = vmatprep.subr.mxu0 0.0
    %v797 = vand.u32 %v71, 4294901760
    %798 = vmatpush1.msra.mxu0 %v797
    %799 = vmatprep.subr.mxu0 0.0
    %v800 = vand.u32 %v72, 4294901760
    %801 = vmatpush1.msra.mxu0 %v800
    %802 = vmatprep.subr.mxu0 0.0
    %v803 = vand.u32 %v73, 4294901760
    %804 = vmatpush1.msra.mxu0 %v803
    %805 = vmatprep.subr.mxu0 0.0
    %v806 = vand.u32 %v74, 4294901760
    %807 = vmatpush1.msra.mxu0 %v806
    %808 = vmatprep.subr.mxu0 0.0
    %v809 = vand.u32 %v75, 4294901760
    %810 = vmatpush1.msra.mxu0 %v809
    %811 = vmatprep.subr.mxu0 0.0
    %v812 = vand.u32 %v76, 4294901760
    %813 = vmatpush1.msra.mxu0 %v812
    %814 = vmatprep.subr.mxu0 0.0
    %v815 = vand.u32 %v77, 4294901760
    %816 = vmatpush1.msra.mxu0 %v815
    %817 = vmatprep.subr.mxu0 0.0
    %818 = vmatpush1.msra.mxu0 0.0
    %819 = vmatprep.subr.mxu0 0.0
    %820 = vmatpush1.msra.mxu0 0.0
    %821 = vmatprep.subr.mxu0 0.0
    %822 = vmatpush1.msra.mxu0 0.0
    %823 = vmatprep.subr.mxu0 0.0
    %824 = vmatpush1.msra.mxu0 0.0
    %825 = vmatprep.subr.mxu0 0.0
    %826 = vmatpush1.msra.mxu0 0.0
    %827 = vmatprep.subr.mxu0 0.0
    %828 = vmatpush1.msra.mxu0 0.0
    %829 = vmatprep.subr.mxu0 0.0
    %830 = vmatpush1.msra.mxu0 0.0
    %831 = vmatprep.subr.mxu0 0.0
    %832 = vmatpush1.msra.mxu0 0.0
    %833 = vmatprep.subr.mxu0 0.0
    %834 = vmatpush1.msra.mxu0 0.0
    %835 = vmatprep.subr.mxu0 0.0
    %836 = vmatpush1.msra.mxu0 0.0
    %837 = vmatprep.subr.mxu0 0.0
    %838 = vmatpush1.msra.mxu0 0.0
    %839 = vmatprep.subr.mxu0 0.0
    %840 = vmatpush1.msra.mxu0 0.0
    %841 = vmatprep.subr.mxu0 0.0
    %842 = vmatpush1.msra.mxu0 0.0
    %843 = vmatprep.subr.mxu0 0.0
    %844 = vmatpush1.msra.mxu0 0.0
    %845 = vmatprep.subr.mxu0 0.0
    %846 = vmatpush1.msra.mxu0 0.0
    %847 = vmatprep.subr.mxu0 0.0
    %848 = vmatpush1.msra.mxu0 0.0
    %849 = vmatprep.mubr.f32.mxu0 0.0
    %v850 = vand.u32 %v46, 4294901760
    %v851 = vsub.f32 %v46, %v850
    %v852 = vand.u32 %v851, 4294901760
    %853 = vmatmul.mubr.f32.gmra.mrb[0].mxu0 %v852
    %v854 = vpop.f32.mrb[0].mxu0
    %v855 = vadd.f32 %v661, %v854
    %v856 = vpop.f32.mrb[0].mxu0
    %857 = vmatprep.mubr.f32.mxu0 0.0
    %v858 = vand.u32 %v47, 4294901760
    %v859 = vsub.f32 %v47, %v858
    %v860 = vand.u32 %v859, 4294901760
    %861 = vmatmul.mubr.f32.gmra.mrb[0].mxu0 %v860
    %v862 = vpop.f32.mrb[0].mxu0
    %v863 = vadd.f32 %v668, %v862
    %v864 = vpop.f32.mrb[0].mxu0
    %865 = vmatprep.mubr.f32.mxu0 0.0
    %v866 = vand.u32 %v48, 4294901760
    %v867 = vsub.f32 %v48, %v866
    %v868 = vand.u32 %v867, 4294901760
    %869 = vmatmul.mubr.f32.gmra.mrb[0].mxu0 %v868
    %v870 = vpop.f32.mrb[0].mxu0
    %v871 = vadd.f32 %v675, %v870
    %v872 = vpop.f32.mrb[0].mxu0
    %873 = vmatprep.mubr.f32.mxu0 0.0
    %v874 = vand.u32 %v49, 4294901760
    %v875 = vsub.f32 %v49, %v874
    %v876 = vand.u32 %v875, 4294901760
    %877 = vmatmul.mubr.f32.gmra.mrb[0].mxu0 %v876
    %v878 = vpop.f32.mrb[0].mxu0
    %v879 = vadd.f32 %v682, %v878
    %v880 = vpop.f32.mrb[0].mxu0
    %881 = vmatprep.mubr.f32.mxu0 0.0
    %v882 = vand.u32 %v50, 4294901760
    %v883 = vsub.f32 %v50, %v882
    %v884 = vand.u32 %v883, 4294901760
    %885 = vmatmul.mubr.f32.gmra.mrb[0].mxu0 %v884
    %v886 = vpop.f32.mrb[0].mxu0
    %v887 = vadd.f32 %v689, %v886
    %v888 = vpop.f32.mrb[0].mxu0
    %889 = vmatprep.mubr.f32.mxu0 0.0
    %v890 = vand.u32 %v51, 4294901760
    %v891 = vsub.f32 %v51, %v890
    %v892 = vand.u32 %v891, 4294901760
    %893 = vmatmul.mubr.f32.gmra.mrb[0].mxu0 %v892
    %v894 = vpop.f32.mrb[0].mxu0
    %v895 = vadd.f32 %v696, %v894
    %v896 = vpop.f32.mrb[0].mxu0
    %897 = vmatprep.mubr.f32.mxu0 0.0
    %v898 = vand.u32 %v52, 4294901760
    %v899 = vsub.f32 %v52, %v898
    %v900 = vand.u32 %v899, 4294901760
    %901 = vmatmul.mubr.f32.gmra.mrb[0].mxu0 %v900
    %v902 = vpop.f32.mrb[0].mxu0
    %v903 = vadd.f32 %v703, %v902
    %v904 = vpop.f32.mrb[0].mxu0
    %905 = vmatprep.mubr.f32.mxu0 0.0
    %v906 = vand.u32 %v53, 4294901760
    %v907 = vsub.f32 %v53, %v906
    %v908 = vand.u32 %v907, 4294901760
    %909 = vmatmul.mubr.f32.gmra.mrb[0].mxu0 %v908
    %v910 = vpop.f32.mrb[0].mxu0
    %v911 = vadd.f32 %v710, %v910
    %v912 = vpop.f32.mrb[0].mxu0
    %913 = vmatprep.mubr.f32.mxu0 0.0
    %v914 = vand.u32 %v54, 4294901760
    %v915 = vsub.f32 %v54, %v914
    %v916 = vand.u32 %v915, 4294901760
    %917 = vmatmul.mubr.f32.gmra.mrb[0].mxu0 %v916
    %v918 = vpop.f32.mrb[0].mxu0
    %v919 = vadd.f32 %v717, %v918
    %v920 = vpop.f32.mrb[0].mxu0
    %921 = vmatprep.mubr.f32.mxu0 0.0
    %v922 = vand.u32 %v55, 4294901760
    %v923 = vsub.f32 %v55, %v922
    %v924 = vand.u32 %v923, 4294901760
    %925 = vmatmul.mubr.f32.gmra.mrb[0].mxu0 %v924
    %v926 = vpop.f32.mrb[0].mxu0
    %v927 = vadd.f32 %v724, %v926
    %v928 = vpop.f32.mrb[0].mxu0
    %929 = vmatprep.mubr.f32.mxu0 0.0
    %v930 = vand.u32 %v56, 4294901760
    %v931 = vsub.f32 %v56, %v930
    %v932 = vand.u32 %v931, 4294901760
    %933 = vmatmul.mubr.f32.gmra.mrb[0].mxu0 %v932
    %v934 = vpop.f32.mrb[0].mxu0
    %v935 = vadd.f32 %v731, %v934
    %v936 = vpop.f32.mrb[0].mxu0
    %937 = vmatprep.mubr.f32.mxu0 0.0
    %v938 = vand.u32 %v57, 4294901760
    %v939 = vsub.f32 %v57, %v938
    %v940 = vand.u32 %v939, 4294901760
    %941 = vmatmul.mubr.f32.gmra.mrb[0].mxu0 %v940
    %v942 = vpop.f32.mrb[0].mxu0
    %v943 = vadd.f32 %v738, %v942
    %v944 = vpop.f32.mrb[0].mxu0
    %945 = vmatprep.mubr.f32.mxu0 0.0
    %v946 = vand.u32 %v58, 4294901760
    %v947 = vsub.f32 %v58, %v946
    %v948 = vand.u32 %v947, 4294901760
    %949 = vmatmul.mubr.f32.gmra.mrb[0].mxu0 %v948
    %v950 = vpop.f32.mrb[0].mxu0
    %v951 = vadd.f32 %v745, %v950
    %v952 = vpop.f32.mrb[0].mxu0
    %953 = vmatprep.mubr.f32.mxu0 0.0
    %v954 = vand.u32 %v59, 4294901760
    %v955 = vsub.f32 %v59, %v954
    %v956 = vand.u32 %v955, 4294901760
    %957 = vmatmul.mubr.f32.gmra.mrb[0].mxu0 %v956
    %v958 = vpop.f32.mrb[0].mxu0
    %v959 = vadd.f32 %v752, %v958
    %v960 = vpop.f32.mrb[0].mxu0
    %961 = vmatprep.mubr.f32.mxu0 0.0
    %v962 = vand.u32 %v60, 4294901760
    %v963 = vsub.f32 %v60, %v962
    %v964 = vand.u32 %v963, 4294901760
    %965 = vmatmul.mubr.f32.gmra.mrb[0].mxu0 %v964
    %v966 = vpop.f32.mrb[0].mxu0
    %v967 = vadd.f32 %v759, %v966
    %v968 = vpop.f32.mrb[0].mxu0
    %969 = vmatprep.mubr.f32.mxu0 0.0
    %v970 = vand.u32 %v61, 4294901760
    %v971 = vsub.f32 %v61, %v970
    %v972 = vand.u32 %v971, 4294901760
    %973 = vmatmul.mubr.f32.gmra.mrb[0].mxu0 %v972
    %v974 = vpop.f32.mrb[0].mxu0
    %v975 = vadd.f32 %v766, %v974
    %v976 = vpop.f32.mrb[0].mxu0
    %977 = vdwg.mxu0
    %978 = vmatprep.subr.mxu0 0.0
    %v979 = vand.u32 %v62, 4294901760
    %v980 = vsub.f32 %v62, %v979
    %v981 = vand.u32 %v980, 4294901760
    %982 = vmatpush1.msra.mxu0 %v981
    %983 = vmatprep.subr.mxu0 0.0
    %v984 = vand.u32 %v63, 4294901760
    %v985 = vsub.f32 %v63, %v984
    %v986 = vand.u32 %v985, 4294901760
    %987 = vmatpush1.msra.mxu0 %v986
    %988 = vmatprep.subr.mxu0 0.0
    %v989 = vand.u32 %v64, 4294901760
    %v990 = vsub.f32 %v64, %v989
    %v991 = vand.u32 %v990, 4294901760
    %992 = vmatpush1.msra.mxu0 %v991
    %993 = vmatprep.subr.mxu0 0.0
    %v994 = vand.u32 %v65, 4294901760
    %v995 = vsub.f32 %v65, %v994
    %v996 = vand.u32 %v995, 4294901760
    %997 = vmatpush1.msra.mxu0 %v996
    %998 = vmatprep.subr.mxu0 0.0
    %v999 = vand.u32 %v66, 4294901760
    %v1000 = vsub.f32 %v66, %v999
    %v1001 = vand.u32 %v1000, 4294901760
    %1002 = vmatpush1.msra.mxu0 %v1001
    %1003 = vmatprep.subr.mxu0 0.0
    %v1004 = vand.u32 %v67, 4294901760
    %v1005 = vsub.f32 %v67, %v1004
    %v1006 = vand.u32 %v1005, 4294901760
    %1007 = vmatpush1.msra.mxu0 %v1006
    %1008 = vmatprep.subr.mxu0 0.0
    %v1009 = vand.u32 %v68, 4294901760
    %v1010 = vsub.f32 %v68, %v1009
    %v1011 = vand.u32 %v1010, 4294901760
    %1012 = vmatpush1.msra.mxu0 %v1011
    %1013 = vmatprep.subr.mxu0 0.0
    %v1014 = vand.u32 %v69, 4294901760
    %v1015 = vsub.f32 %v69, %v1014
    %v1016 = vand.u32 %v1015, 4294901760
    %1017 = vmatpush1.msra.mxu0 %v1016
    %1018 = vmatprep.subr.mxu0 0.0
    %v1019 = vand.u32 %v70, 4294901760
    %v1020 = vsub.f32 %v70, %v1019
    %v1021 = vand.u32 %v1020, 4294901760
    %1022 = vmatpush1.msra.mxu0 %v1021
    %1023 = vmatprep.subr.mxu0 0.0
    %v1024 = vand.u32 %v71, 4294901760
    %v1025 = vsub.f32 %v71, %v1024
    %v1026 = vand.u32 %v1025, 4294901760
    %1027 = vmatpush1.msra.mxu0 %v1026
    %1028 = vmatprep.subr.mxu0 0.0
    %v1029 = vand.u32 %v72, 4294901760
    %v1030 = vsub.f32 %v72, %v1029
    %v1031 = vand.u32 %v1030, 4294901760
    %1032 = vmatpush1.msra.mxu0 %v1031
    %1033 = vmatprep.subr.mxu0 0.0
    %v1034 = vand.u32 %v73, 4294901760
    %v1035 = vsub.f32 %v73, %v1034
    %v1036 = vand.u32 %v1035, 4294901760
    %1037 = vmatpush1.msra.mxu0 %v1036
    %1038 = vmatprep.subr.mxu0 0.0
    %v1039 = vand.u32 %v74, 4294901760
    %v1040 = vsub.f32 %v74, %v1039
    %v1041 = vand.u32 %v1040, 4294901760
    %1042 = vmatpush1.msra.mxu0 %v1041
    %1043 = vmatprep.subr.mxu0 0.0
    %v1044 = vand.u32 %v75, 4294901760
    %v1045 = vsub.f32 %v75, %v1044
    %v1046 = vand.u32 %v1045, 4294901760
    %1047 = vmatpush1.msra.mxu0 %v1046
    %1048 = vmatprep.subr.mxu0 0.0
    %v1049 = vand.u32 %v76, 4294901760
    %v1050 = vsub.f32 %v76, %v1049
    %v1051 = vand.u32 %v1050, 4294901760
    %1052 = vmatpush1.msra.mxu0 %v1051
    %1053 = vmatprep.subr.mxu0 0.0
    %v1054 = vand.u32 %v77, 4294901760
    %v1055 = vsub.f32 %v77, %v1054
    %v1056 = vand.u32 %v1055, 4294901760
    %1057 = vmatpush1.msra.mxu0 %v1056
    %1058 = vmatprep.subr.mxu0 0.0
    %1059 = vmatpush1.msra.mxu0 0.0
    %1060 = vmatprep.subr.mxu0 0.0
    %1061 = vmatpush1.msra.mxu0 0.0
    %1062 = vmatprep.subr.mxu0 0.0
    %1063 = vmatpush1.msra.mxu0 0.0
    %1064 = vmatprep.subr.mxu0 0.0
    %1065 = vmatpush1.msra.mxu0 0.0
    %1066 = vmatprep.subr.mxu0 0.0
    %1067 = vmatpush1.msra.mxu0 0.0
    %1068 = vmatprep.subr.mxu0 0.0
    %1069 = vmatpush1.msra.mxu0 0.0
    %1070 = vmatprep.subr.mxu0 0.0
    %1071 = vmatpush1.msra.mxu0 0.0
    %1072 = vmatprep.subr.mxu0 0.0
    %1073 = vmatpush1.msra.mxu0 0.0
    %1074 = vmatprep.subr.mxu0 0.0
    %1075 = vmatpush1.msra.mxu0 0.0
    %1076 = vmatprep.subr.mxu0 0.0
    %1077 = vmatpush1.msra.mxu0 0.0
    %1078 = vmatprep.subr.mxu0 0.0
    %1079 = vmatpush1.msra.mxu0 0.0
    %1080 = vmatprep.subr.mxu0 0.0
    %1081 = vmatpush1.msra.mxu0 0.0
    %1082 = vmatprep.subr.mxu0 0.0
    %1083 = vmatpush1.msra.mxu0 0.0
    %1084 = vmatprep.subr.mxu0 0.0
    %1085 = vmatpush1.msra.mxu0 0.0
    %1086 = vmatprep.subr.mxu0 0.0
    %1087 = vmatpush1.msra.mxu0 0.0
    %1088 = vmatprep.subr.mxu0 0.0
    %1089 = vmatpush1.msra.mxu0 0.0
    %1090 = vmatprep.mubr.f32.mxu0 0.0
    %v1091 = vand.u32 %v46, 4294901760
    %1092 = vmatmul.mubr.f32.gmra.mrb[0].mxu0 %v1091
    %v1093 = vpop.f32.mrb[0].mxu0
    %v1094 = vadd.f32 %v855, %v1093
    %v1095 = vpop.f32.mrb[0].mxu0
    %1096 = vmatprep.mubr.f32.mxu0 0.0
    %v1097 = vand.u32 %v47, 4294901760
    %1098 = vmatmul.mubr.f32.gmra.mrb[0].mxu0 %v1097
    %v1099 = vpop.f32.mrb[0].mxu0
    %v1100 = vadd.f32 %v863, %v1099
    %v1101 = vpop.f32.mrb[0].mxu0
    %1102 = vmatprep.mubr.f32.mxu0 0.0
    %v1103 = vand.u32 %v48, 4294901760
    %1104 = vmatmul.mubr.f32.gmra.mrb[0].mxu0 %v1103
    %v1105 = vpop.f32.mrb[0].mxu0
    %v1106 = vadd.f32 %v871, %v1105
    %v1107 = vpop.f32.mrb[0].mxu0
    %1108 = vmatprep.mubr.f32.mxu0 0.0
    %v1109 = vand.u32 %v49, 4294901760
    %1110 = vmatmul.mubr.f32.gmra.mrb[0].mxu0 %v1109
    %v1111 = vpop.f32.mrb[0].mxu0
    %v1112 = vadd.f32 %v879, %v1111
    %v1113 = vpop.f32.mrb[0].mxu0
    %1114 = vmatprep.mubr.f32.mxu0 0.0
    %v1115 = vand.u32 %v50, 4294901760
    %1116 = vmatmul.mubr.f32.gmra.mrb[0].mxu0 %v1115
    %v1117 = vpop.f32.mrb[0].mxu0
    %v1118 = vadd.f32 %v887, %v1117
    %v1119 = vpop.f32.mrb[0].mxu0
    %1120 = vmatprep.mubr.f32.mxu0 0.0
    %v1121 = vand.u32 %v51, 4294901760
    %1122 = vmatmul.mubr.f32.gmra.mrb[0].mxu0 %v1121
    %v1123 = vpop.f32.mrb[0].mxu0
    %v1124 = vadd.f32 %v895, %v1123
    %v1125 = vpop.f32.mrb[0].mxu0
    %1126 = vmatprep.mubr.f32.mxu0 0.0
    %v1127 = vand.u32 %v52, 4294901760
    %1128 = vmatmul.mubr.f32.gmra.mrb[0].mxu0 %v1127
    %v1129 = vpop.f32.mrb[0].mxu0
    %v1130 = vadd.f32 %v903, %v1129
    %v1131 = vpop.f32.mrb[0].mxu0
    %1132 = vmatprep.mubr.f32.mxu0 0.0
    %v1133 = vand.u32 %v53, 4294901760
    %1134 = vmatmul.mubr.f32.gmra.mrb[0].mxu0 %v1133
    %v1135 = vpop.f32.mrb[0].mxu0
    %v1136 = vadd.f32 %v911, %v1135
    %v1137 = vpop.f32.mrb[0].mxu0
    %1138 = vmatprep.mubr.f32.mxu0 0.0
    %v1139 = vand.u32 %v54, 4294901760
    %1140 = vmatmul.mubr.f32.gmra.mrb[0].mxu0 %v1139
    %v1141 = vpop.f32.mrb[0].mxu0
    %v1142 = vadd.f32 %v919, %v1141
    %v1143 = vpop.f32.mrb[0].mxu0
    %1144 = vmatprep.mubr.f32.mxu0 0.0
    %v1145 = vand.u32 %v55, 4294901760
    %1146 = vmatmul.mubr.f32.gmra.mrb[0].mxu0 %v1145
    %v1147 = vpop.f32.mrb[0].mxu0
    %v1148 = vadd.f32 %v927, %v1147
    %v1149 = vpop.f32.mrb[0].mxu0
    %1150 = vmatprep.mubr.f32.mxu0 0.0
    %v1151 = vand.u32 %v56, 4294901760
    %1152 = vmatmul.mubr.f32.gmra.mrb[0].mxu0 %v1151
    %v1153 = vpop.f32.mrb[0].mxu0
    %v1154 = vadd.f32 %v935, %v1153
    %v1155 = vpop.f32.mrb[0].mxu0
    %1156 = vmatprep.mubr.f32.mxu0 0.0
    %v1157 = vand.u32 %v57, 4294901760
    %1158 = vmatmul.mubr.f32.gmra.mrb[0].mxu0 %v1157
    %v1159 = vpop.f32.mrb[0].mxu0
    %v1160 = vadd.f32 %v943, %v1159
    %v1161 = vpop.f32.mrb[0].mxu0
    %1162 = vmatprep.mubr.f32.mxu0 0.0
    %v1163 = vand.u32 %v58, 4294901760
    %1164 = vmatmul.mubr.f32.gmra.mrb[0].mxu0 %v1163
    %v1165 = vpop.f32.mrb[0].mxu0
    %v1166 = vadd.f32 %v951, %v1165
    %v1167 = vpop.f32.mrb[0].mxu0
    %1168 = vmatprep.mubr.f32.mxu0 0.0
    %v1169 = vand.u32 %v59, 4294901760
    %1170 = vmatmul.mubr.f32.gmra.mrb[0].mxu0 %v1169
    %v1171 = vpop.f32.mrb[0].mxu0
    %v1172 = vadd.f32 %v959, %v1171
    %v1173 = vpop.f32.mrb[0].mxu0
    %1174 = vmatprep.mubr.f32.mxu0 0.0
    %v1175 = vand.u32 %v60, 4294901760
    %1176 = vmatmul.mubr.f32.gmra.mrb[0].mxu0 %v1175
    %v1177 = vpop.f32.mrb[0].mxu0
    %v1178 = vadd.f32 %v967, %v1177
    %v1179 = vpop.f32.mrb[0].mxu0
    %1180 = vmatprep.mubr.f32.mxu0 0.0
    %v1181 = vand.u32 %v61, 4294901760
    %1182 = vmatmul.mubr.f32.gmra.mrb[0].mxu0 %v1181
    %v1183 = vpop.f32.mrb[0].mxu0
    %v1184 = vadd.f32 %v975, %v1183
    %v1185 = vpop.f32.mrb[0].mxu0
    %1186 = vdwg.mxu0
    %1187 = vmatprep.subr.mxu0 0.0
    %v1188 = vand.u32 %v62, 4294901760
    %1189 = vmatpush1.msra.mxu0 %v1188
    %1190 = vmatprep.subr.mxu0 0.0
    %v1191 = vand.u32 %v63, 4294901760
    %1192 = vmatpush1.msra.mxu0 %v1191
    %1193 = vmatprep.subr.mxu0 0.0
    %v1194 = vand.u32 %v64, 4294901760
    %1195 = vmatpush1.msra.mxu0 %v1194
    %1196 = vmatprep.subr.mxu0 0.0
    %v1197 = vand.u32 %v65, 4294901760
    %1198 = vmatpush1.msra.mxu0 %v1197
    %1199 = vmatprep.subr.mxu0 0.0
    %v1200 = vand.u32 %v66, 4294901760
    %1201 = vmatpush1.msra.mxu0 %v1200
    %1202 = vmatprep.subr.mxu0 0.0
    %v1203 = vand.u32 %v67, 4294901760
    %1204 = vmatpush1.msra.mxu0 %v1203
    %1205 = vmatprep.subr.mxu0 0.0
    %v1206 = vand.u32 %v68, 4294901760
    %1207 = vmatpush1.msra.mxu0 %v1206
    %1208 = vmatprep.subr.mxu0 0.0
    %v1209 = vand.u32 %v69, 4294901760
    %1210 = vmatpush1.msra.mxu0 %v1209
    %1211 = vmatprep.subr.mxu0 0.0
    %v1212 = vand.u32 %v70, 4294901760
    %1213 = vmatpush1.msra.mxu0 %v1212
    %1214 = vmatprep.subr.mxu0 0.0
    %v1215 = vand.u32 %v71, 4294901760
    %1216 = vmatpush1.msra.mxu0 %v1215
    %1217 = vmatprep.subr.mxu0 0.0
    %v1218 = vand.u32 %v72, 4294901760
    %1219 = vmatpush1.msra.mxu0 %v1218
    %1220 = vmatprep.subr.mxu0 0.0
    %v1221 = vand.u32 %v73, 4294901760
    %1222 = vmatpush1.msra.mxu0 %v1221
    %1223 = vmatprep.subr.mxu0 0.0
    %v1224 = vand.u32 %v74, 4294901760
    %1225 = vmatpush1.msra.mxu0 %v1224
    %1226 = vmatprep.subr.mxu0 0.0
    %v1227 = vand.u32 %v75, 4294901760
    %1228 = vmatpush1.msra.mxu0 %v1227
    %1229 = vmatprep.subr.mxu0 0.0
    %v1230 = vand.u32 %v76, 4294901760
    %1231 = vmatpush1.msra.mxu0 %v1230
    %1232 = vmatprep.subr.mxu0 0.0
    %v1233 = vand.u32 %v77, 4294901760
    %1234 = vmatpush1.msra.mxu0 %v1233
    %1235 = vmatprep.subr.mxu0 0.0
    %1236 = vmatpush1.msra.mxu0 0.0
    %1237 = vmatprep.subr.mxu0 0.0
    %1238 = vmatpush1.msra.mxu0 0.0
    %1239 = vmatprep.subr.mxu0 0.0
    %1240 = vmatpush1.msra.mxu0 0.0
    %1241 = vmatprep.subr.mxu0 0.0
    %1242 = vmatpush1.msra.mxu0 0.0
    %1243 = vmatprep.subr.mxu0 0.0
    %1244 = vmatpush1.msra.mxu0 0.0
    %1245 = vmatprep.subr.mxu0 0.0
    %1246 = vmatpush1.msra.mxu0 0.0
    %1247 = vmatprep.subr.mxu0 0.0
    %1248 = vmatpush1.msra.mxu0 0.0
    %1249 = vmatprep.subr.mxu0 0.0
    %1250 = vmatpush1.msra.mxu0 0.0
    %1251 = vmatprep.subr.mxu0 0.0
    %1252 = vmatpush1.msra.mxu0 0.0
    %1253 = vmatprep.subr.mxu0 0.0
    %1254 = vmatpush1.msra.mxu0 0.0
    %1255 = vmatprep.subr.mxu0 0.0
    %1256 = vmatpush1.msra.mxu0 0.0
    %1257 = vmatprep.subr.mxu0 0.0
    %1258 = vmatpush1.msra.mxu0 0.0
    %1259 = vmatprep.subr.mxu0 0.0
    %1260 = vmatpush1.msra.mxu0 0.0
    %1261 = vmatprep.subr.mxu0 0.0
    %1262 = vmatpush1.msra.mxu0 0.0
    %1263 = vmatprep.subr.mxu0 0.0
    %1264 = vmatpush1.msra.mxu0 0.0
    %1265 = vmatprep.subr.mxu0 0.0
    %1266 = vmatpush1.msra.mxu0 0.0
    %1267 = vmatprep.mubr.f32.mxu0 0.0
    %v1268 = vand.u32 %v46, 4294901760
    %1269 = vmatmul.mubr.f32.gmra.mrb[0].mxu0 %v1268
    %v1270 = vpop.f32.mrb[0].mxu0
    %v1271 = vadd.f32 %v1094, %v1270
    %v1272 = vpop.f32.mrb[0].mxu0
    %1273 = vmatprep.mubr.f32.mxu0 0.0
    %v1274 = vand.u32 %v47, 4294901760
    %1275 = vmatmul.mubr.f32.gmra.mrb[0].mxu0 %v1274
    %v1276 = vpop.f32.mrb[0].mxu0
    %v1277 = vadd.f32 %v1100, %v1276
    %v1278 = vpop.f32.mrb[0].mxu0
    %1279 = vmatprep.mubr.f32.mxu0 0.0
    %v1280 = vand.u32 %v48, 4294901760
    %1281 = vmatmul.mubr.f32.gmra.mrb[0].mxu0 %v1280
    %v1282 = vpop.f32.mrb[0].mxu0
    %v1283 = vadd.f32 %v1106, %v1282
    %v1284 = vpop.f32.mrb[0].mxu0
    %1285 = vmatprep.mubr.f32.mxu0 0.0
    %v1286 = vand.u32 %v49, 4294901760
    %1287 = vmatmul.mubr.f32.gmra.mrb[0].mxu0 %v1286
    %v1288 = vpop.f32.mrb[0].mxu0
    %v1289 = vadd.f32 %v1112, %v1288
    %v1290 = vpop.f32.mrb[0].mxu0
    %1291 = vmatprep.mubr.f32.mxu0 0.0
    %v1292 = vand.u32 %v50, 4294901760
    %1293 = vmatmul.mubr.f32.gmra.mrb[0].mxu0 %v1292
    %v1294 = vpop.f32.mrb[0].mxu0
    %v1295 = vadd.f32 %v1118, %v1294
    %v1296 = vpop.f32.mrb[0].mxu0
    %1297 = vmatprep.mubr.f32.mxu0 0.0
    %v1298 = vand.u32 %v51, 4294901760
    %1299 = vmatmul.mubr.f32.gmra.mrb[0].mxu0 %v1298
    %v1300 = vpop.f32.mrb[0].mxu0
    %v1301 = vadd.f32 %v1124, %v1300
    %v1302 = vpop.f32.mrb[0].mxu0
    %1303 = vmatprep.mubr.f32.mxu0 0.0
    %v1304 = vand.u32 %v52, 4294901760
    %1305 = vmatmul.mubr.f32.gmra.mrb[0].mxu0 %v1304
    %v1306 = vpop.f32.mrb[0].mxu0
    %v1307 = vadd.f32 %v1130, %v1306
    %v1308 = vpop.f32.mrb[0].mxu0
    %1309 = vmatprep.mubr.f32.mxu0 0.0
    %v1310 = vand.u32 %v53, 4294901760
    %1311 = vmatmul.mubr.f32.gmra.mrb[0].mxu0 %v1310
    %v1312 = vpop.f32.mrb[0].mxu0
    %v1313 = vadd.f32 %v1136, %v1312
    %v1314 = vpop.f32.mrb[0].mxu0
    %1315 = vmatprep.mubr.f32.mxu0 0.0
    %v1316 = vand.u32 %v54, 4294901760
    %1317 = vmatmul.mubr.f32.gmra.mrb[0].mxu0 %v1316
    %v1318 = vpop.f32.mrb[0].mxu0
    %v1319 = vadd.f32 %v1142, %v1318
    %v1320 = vpop.f32.mrb[0].mxu0
    %1321 = vmatprep.mubr.f32.mxu0 0.0
    %v1322 = vand.u32 %v55, 4294901760
    %1323 = vmatmul.mubr.f32.gmra.mrb[0].mxu0 %v1322
    %v1324 = vpop.f32.mrb[0].mxu0
    %v1325 = vadd.f32 %v1148, %v1324
    %v1326 = vpop.f32.mrb[0].mxu0
    %1327 = vmatprep.mubr.f32.mxu0 0.0
    %v1328 = vand.u32 %v56, 4294901760
    %1329 = vmatmul.mubr.f32.gmra.mrb[0].mxu0 %v1328
    %v1330 = vpop.f32.mrb[0].mxu0
    %v1331 = vadd.f32 %v1154, %v1330
    %v1332 = vpop.f32.mrb[0].mxu0
    %1333 = vmatprep.mubr.f32.mxu0 0.0
    %v1334 = vand.u32 %v57, 4294901760
    %1335 = vmatmul.mubr.f32.gmra.mrb[0].mxu0 %v1334
    %v1336 = vpop.f32.mrb[0].mxu0
    %v1337 = vadd.f32 %v1160, %v1336
    %v1338 = vpop.f32.mrb[0].mxu0
    %1339 = vmatprep.mubr.f32.mxu0 0.0
    %v1340 = vand.u32 %v58, 4294901760
    %1341 = vmatmul.mubr.f32.gmra.mrb[0].mxu0 %v1340
    %v1342 = vpop.f32.mrb[0].mxu0
    %v1343 = vadd.f32 %v1166, %v1342
    %v1344 = vpop.f32.mrb[0].mxu0
    %1345 = vmatprep.mubr.f32.mxu0 0.0
    %v1346 = vand.u32 %v59, 4294901760
    %1347 = vmatmul.mubr.f32.gmra.mrb[0].mxu0 %v1346
    %v1348 = vpop.f32.mrb[0].mxu0
    %v1349 = vadd.f32 %v1172, %v1348
    %v1350 = vpop.f32.mrb[0].mxu0
    %1351 = vmatprep.mubr.f32.mxu0 0.0
    %v1352 = vand.u32 %v60, 4294901760
    %1353 = vmatmul.mubr.f32.gmra.mrb[0].mxu0 %v1352
    %v1354 = vpop.f32.mrb[0].mxu0
    %v1355 = vadd.f32 %v1178, %v1354
    %v1356 = vpop.f32.mrb[0].mxu0
    %1357 = vmatprep.mubr.f32.mxu0 0.0
    %v1358 = vand.u32 %v61, 4294901760
    %1359 = vmatmul.mubr.f32.gmra.mrb[0].mxu0 %v1358
    %v1360 = vpop.f32.mrb[0].mxu0
    %v1361 = vadd.f32 %v1184, %v1360
    %v1362 = vpop.f32.mrb[0].mxu0
    %1363 = vdwg.mxu0
    %v1364 = vmul.f32 %v1271, 0.03125
    %v1365 = vmul.f32 %v1277, 0.03125
    %v1366 = vmul.f32 %v1283, 0.03125
    %v1367 = vmul.f32 %v1289, 0.03125
    %v1368 = vmul.f32 %v1295, 0.03125
    %v1369 = vmul.f32 %v1301, 0.03125
    %v1370 = vmul.f32 %v1307, 0.03125
    %v1371 = vmul.f32 %v1313, 0.03125
    %v1372 = vmul.f32 %v1319, 0.03125
    %v1373 = vmul.f32 %v1325, 0.03125
    %v1374 = vmul.f32 %v1331, 0.03125
    %v1375 = vmul.f32 %v1337, 0.03125
    %v1376 = vmul.f32 %v1343, 0.03125
    %v1377 = vmul.f32 %v1349, 0.03125
    %v1378 = vmul.f32 %v1355, 0.03125
    %v1379 = vmul.f32 %v1361, 0.03125
    %v1380 = vsub.f32 %v46, %v1364
    %v1381 = vsub.f32 %v47, %v1365
    %v1382 = vsub.f32 %v48, %v1366
    %v1383 = vsub.f32 %v49, %v1367
    %v1384 = vsub.f32 %v50, %v1368
    %v1385 = vsub.f32 %v51, %v1369
    %v1386 = vsub.f32 %v52, %v1370
    %v1387 = vsub.f32 %v53, %v1371
    %v1388 = vsub.f32 %v54, %v1372
    %v1389 = vsub.f32 %v55, %v1373
    %v1390 = vsub.f32 %v56, %v1374
    %v1391 = vsub.f32 %v57, %v1375
    %v1392 = vsub.f32 %v58, %v1376
    %v1393 = vsub.f32 %v59, %v1377
    %v1394 = vsub.f32 %v60, %v1378
    %v1395 = vsub.f32 %v61, %v1379
    %v1396 = vmul.f32 %v1380, %v1380
    %v1397 = vmul.f32 %v1381, %v1381
    %v1398 = vmul.f32 %v1382, %v1382
    %v1399 = vmul.f32 %v1383, %v1383
    %v1400 = vmul.f32 %v1384, %v1384
    %v1401 = vmul.f32 %v1385, %v1385
    %v1402 = vmul.f32 %v1386, %v1386
    %v1403 = vmul.f32 %v1387, %v1387
    %v1404 = vmul.f32 %v1388, %v1388
    %v1405 = vmul.f32 %v1389, %v1389
    %v1406 = vmul.f32 %v1390, %v1390
    %v1407 = vmul.f32 %v1391, %v1391
    %v1408 = vmul.f32 %v1392, %v1392
    %v1409 = vmul.f32 %v1393, %v1393
    %v1410 = vmul.f32 %v1394, %v1394
    %v1411 = vmul.f32 %v1395, %v1395
    %1412 = vmatprep.subr.mxu0 0.0
    %v1413 = vand.u32 %v62, 4294901760
    %1414 = vmatpush1.msra.mxu0 %v1413
    %1415 = vmatprep.subr.mxu0 0.0
    %v1416 = vand.u32 %v63, 4294901760
    %1417 = vmatpush1.msra.mxu0 %v1416
    %1418 = vmatprep.subr.mxu0 0.0
    %v1419 = vand.u32 %v64, 4294901760
    %1420 = vmatpush1.msra.mxu0 %v1419
    %1421 = vmatprep.subr.mxu0 0.0
    %v1422 = vand.u32 %v65, 4294901760
    %1423 = vmatpush1.msra.mxu0 %v1422
    %1424 = vmatprep.subr.mxu0 0.0
    %v1425 = vand.u32 %v66, 4294901760
    %1426 = vmatpush1.msra.mxu0 %v1425
    %1427 = vmatprep.subr.mxu0 0.0
    %v1428 = vand.u32 %v67, 4294901760
    %1429 = vmatpush1.msra.mxu0 %v1428
    %1430 = vmatprep.subr.mxu0 0.0
    %v1431 = vand.u32 %v68, 4294901760
    %1432 = vmatpush1.msra.mxu0 %v1431
    %1433 = vmatprep.subr.mxu0 0.0
    %v1434 = vand.u32 %v69, 4294901760
    %1435 = vmatpush1.msra.mxu0 %v1434
    %1436 = vmatprep.subr.mxu0 0.0
    %v1437 = vand.u32 %v70, 4294901760
    %1438 = vmatpush1.msra.mxu0 %v1437
    %1439 = vmatprep.subr.mxu0 0.0
    %v1440 = vand.u32 %v71, 4294901760
    %1441 = vmatpush1.msra.mxu0 %v1440
    %1442 = vmatprep.subr.mxu0 0.0
    %v1443 = vand.u32 %v72, 4294901760
    %1444 = vmatpush1.msra.mxu0 %v1443
    %1445 = vmatprep.subr.mxu0 0.0
    %v1446 = vand.u32 %v73, 4294901760
    %1447 = vmatpush1.msra.mxu0 %v1446
    %1448 = vmatprep.subr.mxu0 0.0
    %v1449 = vand.u32 %v74, 4294901760
    %1450 = vmatpush1.msra.mxu0 %v1449
    %1451 = vmatprep.subr.mxu0 0.0
    %v1452 = vand.u32 %v75, 4294901760
    %1453 = vmatpush1.msra.mxu0 %v1452
    %1454 = vmatprep.subr.mxu0 0.0
    %v1455 = vand.u32 %v76, 4294901760
    %1456 = vmatpush1.msra.mxu0 %v1455
    %1457 = vmatprep.subr.mxu0 0.0
    %v1458 = vand.u32 %v77, 4294901760
    %1459 = vmatpush1.msra.mxu0 %v1458
    %1460 = vmatprep.subr.mxu0 0.0
    %1461 = vmatpush1.msra.mxu0 0.0
    %1462 = vmatprep.subr.mxu0 0.0
    %1463 = vmatpush1.msra.mxu0 0.0
    %1464 = vmatprep.subr.mxu0 0.0
    %1465 = vmatpush1.msra.mxu0 0.0
    %1466 = vmatprep.subr.mxu0 0.0
    %1467 = vmatpush1.msra.mxu0 0.0
    %1468 = vmatprep.subr.mxu0 0.0
    %1469 = vmatpush1.msra.mxu0 0.0
    %1470 = vmatprep.subr.mxu0 0.0
    %1471 = vmatpush1.msra.mxu0 0.0
    %1472 = vmatprep.subr.mxu0 0.0
    %1473 = vmatpush1.msra.mxu0 0.0
    %1474 = vmatprep.subr.mxu0 0.0
    %1475 = vmatpush1.msra.mxu0 0.0
    %1476 = vmatprep.subr.mxu0 0.0
    %1477 = vmatpush1.msra.mxu0 0.0
    %1478 = vmatprep.subr.mxu0 0.0
    %1479 = vmatpush1.msra.mxu0 0.0
    %1480 = vmatprep.subr.mxu0 0.0
    %1481 = vmatpush1.msra.mxu0 0.0
    %1482 = vmatprep.subr.mxu0 0.0
    %1483 = vmatpush1.msra.mxu0 0.0
    %1484 = vmatprep.subr.mxu0 0.0
    %1485 = vmatpush1.msra.mxu0 0.0
    %1486 = vmatprep.subr.mxu0 0.0
    %1487 = vmatpush1.msra.mxu0 0.0
    %1488 = vmatprep.subr.mxu0 0.0
    %1489 = vmatpush1.msra.mxu0 0.0
    %1490 = vmatprep.subr.mxu0 0.0
    %1491 = vmatpush1.msra.mxu0 0.0
    %1492 = vmatprep.mubr.f32.mxu0 0.0
    %v1493 = vand.u32 %v1396, 4294901760
    %v1494 = vsub.f32 %v1396, %v1493
    %v1495 = vand.u32 %v1494, 4294901760
    %v1496 = vsub.f32 %v1494, %v1495
    %v1497 = vand.u32 %v1496, 4294901760
    %1498 = vmatmul.mubr.f32.gmra.mrb[0].mxu0 %v1497
    %v1499 = vpop.f32.mrb[0].mxu0
    %v1500 = vadd.f32 0.0, %v1499
    %v1501 = vpop.f32.mrb[0].mxu0
    %1502 = vmatprep.mubr.f32.mxu0 0.0
    %v1503 = vand.u32 %v1397, 4294901760
    %v1504 = vsub.f32 %v1397, %v1503
    %v1505 = vand.u32 %v1504, 4294901760
    %v1506 = vsub.f32 %v1504, %v1505
    %v1507 = vand.u32 %v1506, 4294901760
    %1508 = vmatmul.mubr.f32.gmra.mrb[0].mxu0 %v1507
    %v1509 = vpop.f32.mrb[0].mxu0
    %v1510 = vadd.f32 0.0, %v1509
    %v1511 = vpop.f32.mrb[0].mxu0
    %1512 = vmatprep.mubr.f32.mxu0 0.0
    %v1513 = vand.u32 %v1398, 4294901760
    %v1514 = vsub.f32 %v1398, %v1513
    %v1515 = vand.u32 %v1514, 4294901760
    %v1516 = vsub.f32 %v1514, %v1515
    %v1517 = vand.u32 %v1516, 4294901760
    %1518 = vmatmul.mubr.f32.gmra.mrb[0].mxu0 %v1517
    %v1519 = vpop.f32.mrb[0].mxu0
    %v1520 = vadd.f32 0.0, %v1519
    %v1521 = vpop.f32.mrb[0].mxu0
    %1522 = vmatprep.mubr.f32.mxu0 0.0
    %v1523 = vand.u32 %v1399, 4294901760
    %v1524 = vsub.f32 %v1399, %v1523
    %v1525 = vand.u32 %v1524, 4294901760
    %v1526 = vsub.f32 %v1524, %v1525
    %v1527 = vand.u32 %v1526, 4294901760
    %1528 = vmatmul.mubr.f32.gmra.mrb[0].mxu0 %v1527
    %v1529 = vpop.f32.mrb[0].mxu0
    %v1530 = vadd.f32 0.0, %v1529
    %v1531 = vpop.f32.mrb[0].mxu0
    %1532 = vmatprep.mubr.f32.mxu0 0.0
    %v1533 = vand.u32 %v1400, 4294901760
    %v1534 = vsub.f32 %v1400, %v1533
    %v1535 = vand.u32 %v1534, 4294901760
    %v1536 = vsub.f32 %v1534, %v1535
    %v1537 = vand.u32 %v1536, 4294901760
    %1538 = vmatmul.mubr.f32.gmra.mrb[0].mxu0 %v1537
    %v1539 = vpop.f32.mrb[0].mxu0
    %v1540 = vadd.f32 0.0, %v1539
    %v1541 = vpop.f32.mrb[0].mxu0
    %1542 = vmatprep.mubr.f32.mxu0 0.0
    %v1543 = vand.u32 %v1401, 4294901760
    %v1544 = vsub.f32 %v1401, %v1543
    %v1545 = vand.u32 %v1544, 4294901760
    %v1546 = vsub.f32 %v1544, %v1545
    %v1547 = vand.u32 %v1546, 4294901760
    %1548 = vmatmul.mubr.f32.gmra.mrb[0].mxu0 %v1547
    %v1549 = vpop.f32.mrb[0].mxu0
    %v1550 = vadd.f32 0.0, %v1549
    %v1551 = vpop.f32.mrb[0].mxu0
    %1552 = vmatprep.mubr.f32.mxu0 0.0
    %v1553 = vand.u32 %v1402, 4294901760
    %v1554 = vsub.f32 %v1402, %v1553
    %v1555 = vand.u32 %v1554, 4294901760
    %v1556 = vsub.f32 %v1554, %v1555
    %v1557 = vand.u32 %v1556, 4294901760
    %1558 = vmatmul.mubr.f32.gmra.mrb[0].mxu0 %v1557
    %v1559 = vpop.f32.mrb[0].mxu0
    %v1560 = vadd.f32 0.0, %v1559
    %v1561 = vpop.f32.mrb[0].mxu0
    %1562 = vmatprep.mubr.f32.mxu0 0.0
    %v1563 = vand.u32 %v1403, 4294901760
    %v1564 = vsub.f32 %v1403, %v1563
    %v1565 = vand.u32 %v1564, 4294901760
    %v1566 = vsub.f32 %v1564, %v1565
    %v1567 = vand.u32 %v1566, 4294901760
    %1568 = vmatmul.mubr.f32.gmra.mrb[0].mxu0 %v1567
    %v1569 = vpop.f32.mrb[0].mxu0
    %v1570 = vadd.f32 0.0, %v1569
    %v1571 = vpop.f32.mrb[0].mxu0
    %1572 = vmatprep.mubr.f32.mxu0 0.0
    %v1573 = vand.u32 %v1404, 4294901760
    %v1574 = vsub.f32 %v1404, %v1573
    %v1575 = vand.u32 %v1574, 4294901760
    %v1576 = vsub.f32 %v1574, %v1575
    %v1577 = vand.u32 %v1576, 4294901760
    %1578 = vmatmul.mubr.f32.gmra.mrb[0].mxu0 %v1577
    %v1579 = vpop.f32.mrb[0].mxu0
    %v1580 = vadd.f32 0.0, %v1579
    %v1581 = vpop.f32.mrb[0].mxu0
    %1582 = vmatprep.mubr.f32.mxu0 0.0
    %v1583 = vand.u32 %v1405, 4294901760
    %v1584 = vsub.f32 %v1405, %v1583
    %v1585 = vand.u32 %v1584, 4294901760
    %v1586 = vsub.f32 %v1584, %v1585
    %v1587 = vand.u32 %v1586, 4294901760
    %1588 = vmatmul.mubr.f32.gmra.mrb[0].mxu0 %v1587
    %v1589 = vpop.f32.mrb[0].mxu0
    %v1590 = vadd.f32 0.0, %v1589
    %v1591 = vpop.f32.mrb[0].mxu0
    %1592 = vmatprep.mubr.f32.mxu0 0.0
    %v1593 = vand.u32 %v1406, 4294901760
    %v1594 = vsub.f32 %v1406, %v1593
    %v1595 = vand.u32 %v1594, 4294901760
    %v1596 = vsub.f32 %v1594, %v1595
    %v1597 = vand.u32 %v1596, 4294901760
    %1598 = vmatmul.mubr.f32.gmra.mrb[0].mxu0 %v1597
    %v1599 = vpop.f32.mrb[0].mxu0
    %v1600 = vadd.f32 0.0, %v1599
    %v1601 = vpop.f32.mrb[0].mxu0
    %1602 = vmatprep.mubr.f32.mxu0 0.0
    %v1603 = vand.u32 %v1407, 4294901760
    %v1604 = vsub.f32 %v1407, %v1603
    %v1605 = vand.u32 %v1604, 4294901760
    %v1606 = vsub.f32 %v1604, %v1605
    %v1607 = vand.u32 %v1606, 4294901760
    %1608 = vmatmul.mubr.f32.gmra.mrb[0].mxu0 %v1607
    %v1609 = vpop.f32.mrb[0].mxu0
    %v1610 = vadd.f32 0.0, %v1609
    %v1611 = vpop.f32.mrb[0].mxu0
    %1612 = vmatprep.mubr.f32.mxu0 0.0
    %v1613 = vand.u32 %v1408, 4294901760
    %v1614 = vsub.f32 %v1408, %v1613
    %v1615 = vand.u32 %v1614, 4294901760
    %v1616 = vsub.f32 %v1614, %v1615
    %v1617 = vand.u32 %v1616, 4294901760
    %1618 = vmatmul.mubr.f32.gmra.mrb[0].mxu0 %v1617
    %v1619 = vpop.f32.mrb[0].mxu0
    %v1620 = vadd.f32 0.0, %v1619
    %v1621 = vpop.f32.mrb[0].mxu0
    %1622 = vmatprep.mubr.f32.mxu0 0.0
    %v1623 = vand.u32 %v1409, 4294901760
    %v1624 = vsub.f32 %v1409, %v1623
    %v1625 = vand.u32 %v1624, 4294901760
    %v1626 = vsub.f32 %v1624, %v1625
    %v1627 = vand.u32 %v1626, 4294901760
    %1628 = vmatmul.mubr.f32.gmra.mrb[0].mxu0 %v1627
    %v1629 = vpop.f32.mrb[0].mxu0
    %v1630 = vadd.f32 0.0, %v1629
    %v1631 = vpop.f32.mrb[0].mxu0
    %1632 = vmatprep.mubr.f32.mxu0 0.0
    %v1633 = vand.u32 %v1410, 4294901760
    %v1634 = vsub.f32 %v1410, %v1633
    %v1635 = vand.u32 %v1634, 4294901760
    %v1636 = vsub.f32 %v1634, %v1635
    %v1637 = vand.u32 %v1636, 4294901760
    %1638 = vmatmul.mubr.f32.gmra.mrb[0].mxu0 %v1637
    %v1639 = vpop.f32.mrb[0].mxu0
    %v1640 = vadd.f32 0.0, %v1639
    %v1641 = vpop.f32.mrb[0].mxu0
    %1642 = vmatprep.mubr.f32.mxu0 0.0
    %v1643 = vand.u32 %v1411, 4294901760
    %v1644 = vsub.f32 %v1411, %v1643
    %v1645 = vand.u32 %v1644, 4294901760
    %v1646 = vsub.f32 %v1644, %v1645
    %v1647 = vand.u32 %v1646, 4294901760
    %1648 = vmatmul.mubr.f32.gmra.mrb[0].mxu0 %v1647
    %v1649 = vpop.f32.mrb[0].mxu0
    %v1650 = vadd.f32 0.0, %v1649
    %v1651 = vpop.f32.mrb[0].mxu0
    %1652 = vdwg.mxu0
    %1653 = vmatprep.subr.mxu0 0.0
    %v1654 = vand.u32 %v62, 4294901760
    %v1655 = vsub.f32 %v62, %v1654
    %v1656 = vand.u32 %v1655, 4294901760
    %v1657 = vsub.f32 %v1655, %v1656
    %v1658 = vand.u32 %v1657, 4294901760
    %1659 = vmatpush1.msra.mxu0 %v1658
    %1660 = vmatprep.subr.mxu0 0.0
    %v1661 = vand.u32 %v63, 4294901760
    %v1662 = vsub.f32 %v63, %v1661
    %v1663 = vand.u32 %v1662, 4294901760
    %v1664 = vsub.f32 %v1662, %v1663
    %v1665 = vand.u32 %v1664, 4294901760
    %1666 = vmatpush1.msra.mxu0 %v1665
    %1667 = vmatprep.subr.mxu0 0.0
    %v1668 = vand.u32 %v64, 4294901760
    %v1669 = vsub.f32 %v64, %v1668
    %v1670 = vand.u32 %v1669, 4294901760
    %v1671 = vsub.f32 %v1669, %v1670
    %v1672 = vand.u32 %v1671, 4294901760
    %1673 = vmatpush1.msra.mxu0 %v1672
    %1674 = vmatprep.subr.mxu0 0.0
    %v1675 = vand.u32 %v65, 4294901760
    %v1676 = vsub.f32 %v65, %v1675
    %v1677 = vand.u32 %v1676, 4294901760
    %v1678 = vsub.f32 %v1676, %v1677
    %v1679 = vand.u32 %v1678, 4294901760
    %1680 = vmatpush1.msra.mxu0 %v1679
    %1681 = vmatprep.subr.mxu0 0.0
    %v1682 = vand.u32 %v66, 4294901760
    %v1683 = vsub.f32 %v66, %v1682
    %v1684 = vand.u32 %v1683, 4294901760
    %v1685 = vsub.f32 %v1683, %v1684
    %v1686 = vand.u32 %v1685, 4294901760
    %1687 = vmatpush1.msra.mxu0 %v1686
    %1688 = vmatprep.subr.mxu0 0.0
    %v1689 = vand.u32 %v67, 4294901760
    %v1690 = vsub.f32 %v67, %v1689
    %v1691 = vand.u32 %v1690, 4294901760
    %v1692 = vsub.f32 %v1690, %v1691
    %v1693 = vand.u32 %v1692, 4294901760
    %1694 = vmatpush1.msra.mxu0 %v1693
    %1695 = vmatprep.subr.mxu0 0.0
    %v1696 = vand.u32 %v68, 4294901760
    %v1697 = vsub.f32 %v68, %v1696
    %v1698 = vand.u32 %v1697, 4294901760
    %v1699 = vsub.f32 %v1697, %v1698
    %v1700 = vand.u32 %v1699, 4294901760
    %1701 = vmatpush1.msra.mxu0 %v1700
    %1702 = vmatprep.subr.mxu0 0.0
    %v1703 = vand.u32 %v69, 4294901760
    %v1704 = vsub.f32 %v69, %v1703
    %v1705 = vand.u32 %v1704, 4294901760
    %v1706 = vsub.f32 %v1704, %v1705
    %v1707 = vand.u32 %v1706, 4294901760
    %1708 = vmatpush1.msra.mxu0 %v1707
    %1709 = vmatprep.subr.mxu0 0.0
    %v1710 = vand.u32 %v70, 4294901760
    %v1711 = vsub.f32 %v70, %v1710
    %v1712 = vand.u32 %v1711, 4294901760
    %v1713 = vsub.f32 %v1711, %v1712
    %v1714 = vand.u32 %v1713, 4294901760
    %1715 = vmatpush1.msra.mxu0 %v1714
    %1716 = vmatprep.subr.mxu0 0.0
    %v1717 = vand.u32 %v71, 4294901760
    %v1718 = vsub.f32 %v71, %v1717
    %v1719 = vand.u32 %v1718, 4294901760
    %v1720 = vsub.f32 %v1718, %v1719
    %v1721 = vand.u32 %v1720, 4294901760
    %1722 = vmatpush1.msra.mxu0 %v1721
    %1723 = vmatprep.subr.mxu0 0.0
    %v1724 = vand.u32 %v72, 4294901760
    %v1725 = vsub.f32 %v72, %v1724
    %v1726 = vand.u32 %v1725, 4294901760
    %v1727 = vsub.f32 %v1725, %v1726
    %v1728 = vand.u32 %v1727, 4294901760
    %1729 = vmatpush1.msra.mxu0 %v1728
    %1730 = vmatprep.subr.mxu0 0.0
    %v1731 = vand.u32 %v73, 4294901760
    %v1732 = vsub.f32 %v73, %v1731
    %v1733 = vand.u32 %v1732, 4294901760
    %v1734 = vsub.f32 %v1732, %v1733
    %v1735 = vand.u32 %v1734, 4294901760
    %1736 = vmatpush1.msra.mxu0 %v1735
    %1737 = vmatprep.subr.mxu0 0.0
    %v1738 = vand.u32 %v74, 4294901760
    %v1739 = vsub.f32 %v74, %v1738
    %v1740 = vand.u32 %v1739, 4294901760
    %v1741 = vsub.f32 %v1739, %v1740
    %v1742 = vand.u32 %v1741, 4294901760
    %1743 = vmatpush1.msra.mxu0 %v1742
    %1744 = vmatprep.subr.mxu0 0.0
    %v1745 = vand.u32 %v75, 4294901760
    %v1746 = vsub.f32 %v75, %v1745
    %v1747 = vand.u32 %v1746, 4294901760
    %v1748 = vsub.f32 %v1746, %v1747
    %v1749 = vand.u32 %v1748, 4294901760
    %1750 = vmatpush1.msra.mxu0 %v1749
    %1751 = vmatprep.subr.mxu0 0.0
    %v1752 = vand.u32 %v76, 4294901760
    %v1753 = vsub.f32 %v76, %v1752
    %v1754 = vand.u32 %v1753, 4294901760
    %v1755 = vsub.f32 %v1753, %v1754
    %v1756 = vand.u32 %v1755, 4294901760
    %1757 = vmatpush1.msra.mxu0 %v1756
    %1758 = vmatprep.subr.mxu0 0.0
    %v1759 = vand.u32 %v77, 4294901760
    %v1760 = vsub.f32 %v77, %v1759
    %v1761 = vand.u32 %v1760, 4294901760
    %v1762 = vsub.f32 %v1760, %v1761
    %v1763 = vand.u32 %v1762, 4294901760
    %1764 = vmatpush1.msra.mxu0 %v1763
    %1765 = vmatprep.subr.mxu0 0.0
    %1766 = vmatpush1.msra.mxu0 0.0
    %1767 = vmatprep.subr.mxu0 0.0
    %1768 = vmatpush1.msra.mxu0 0.0
    %1769 = vmatprep.subr.mxu0 0.0
    %1770 = vmatpush1.msra.mxu0 0.0
    %1771 = vmatprep.subr.mxu0 0.0
    %1772 = vmatpush1.msra.mxu0 0.0
    %1773 = vmatprep.subr.mxu0 0.0
    %1774 = vmatpush1.msra.mxu0 0.0
    %1775 = vmatprep.subr.mxu0 0.0
    %1776 = vmatpush1.msra.mxu0 0.0
    %1777 = vmatprep.subr.mxu0 0.0
    %1778 = vmatpush1.msra.mxu0 0.0
    %1779 = vmatprep.subr.mxu0 0.0
    %1780 = vmatpush1.msra.mxu0 0.0
    %1781 = vmatprep.subr.mxu0 0.0
    %1782 = vmatpush1.msra.mxu0 0.0
    %1783 = vmatprep.subr.mxu0 0.0
    %1784 = vmatpush1.msra.mxu0 0.0
    %1785 = vmatprep.subr.mxu0 0.0
    %1786 = vmatpush1.msra.mxu0 0.0
    %1787 = vmatprep.subr.mxu0 0.0
    %1788 = vmatpush1.msra.mxu0 0.0
    %1789 = vmatprep.subr.mxu0 0.0
    %1790 = vmatpush1.msra.mxu0 0.0
    %1791 = vmatprep.subr.mxu0 0.0
    %1792 = vmatpush1.msra.mxu0 0.0
    %1793 = vmatprep.subr.mxu0 0.0
    %1794 = vmatpush1.msra.mxu0 0.0
    %1795 = vmatprep.subr.mxu0 0.0
    %1796 = vmatpush1.msra.mxu0 0.0
    %1797 = vmatprep.mubr.f32.mxu0 0.0
    %v1798 = vand.u32 %v1396, 4294901760
    %1799 = vmatmul.mubr.f32.gmra.mrb[0].mxu0 %v1798
    %v1800 = vpop.f32.mrb[0].mxu0
    %v1801 = vadd.f32 %v1500, %v1800
    %v1802 = vpop.f32.mrb[0].mxu0
    %1803 = vmatprep.mubr.f32.mxu0 0.0
    %v1804 = vand.u32 %v1397, 4294901760
    %1805 = vmatmul.mubr.f32.gmra.mrb[0].mxu0 %v1804
    %v1806 = vpop.f32.mrb[0].mxu0
    %v1807 = vadd.f32 %v1510, %v1806
    %v1808 = vpop.f32.mrb[0].mxu0
    %1809 = vmatprep.mubr.f32.mxu0 0.0
    %v1810 = vand.u32 %v1398, 4294901760
    %1811 = vmatmul.mubr.f32.gmra.mrb[0].mxu0 %v1810
    %v1812 = vpop.f32.mrb[0].mxu0
    %v1813 = vadd.f32 %v1520, %v1812
    %v1814 = vpop.f32.mrb[0].mxu0
    %1815 = vmatprep.mubr.f32.mxu0 0.0
    %v1816 = vand.u32 %v1399, 4294901760
    %1817 = vmatmul.mubr.f32.gmra.mrb[0].mxu0 %v1816
    %v1818 = vpop.f32.mrb[0].mxu0
    %v1819 = vadd.f32 %v1530, %v1818
    %v1820 = vpop.f32.mrb[0].mxu0
    %1821 = vmatprep.mubr.f32.mxu0 0.0
    %v1822 = vand.u32 %v1400, 4294901760
    %1823 = vmatmul.mubr.f32.gmra.mrb[0].mxu0 %v1822
    %v1824 = vpop.f32.mrb[0].mxu0
    %v1825 = vadd.f32 %v1540, %v1824
    %v1826 = vpop.f32.mrb[0].mxu0
    %1827 = vmatprep.mubr.f32.mxu0 0.0
    %v1828 = vand.u32 %v1401, 4294901760
    %1829 = vmatmul.mubr.f32.gmra.mrb[0].mxu0 %v1828
    %v1830 = vpop.f32.mrb[0].mxu0
    %v1831 = vadd.f32 %v1550, %v1830
    %v1832 = vpop.f32.mrb[0].mxu0
    %1833 = vmatprep.mubr.f32.mxu0 0.0
    %v1834 = vand.u32 %v1402, 4294901760
    %1835 = vmatmul.mubr.f32.gmra.mrb[0].mxu0 %v1834
    %v1836 = vpop.f32.mrb[0].mxu0
    %v1837 = vadd.f32 %v1560, %v1836
    %v1838 = vpop.f32.mrb[0].mxu0
    %1839 = vmatprep.mubr.f32.mxu0 0.0
    %v1840 = vand.u32 %v1403, 4294901760
    %1841 = vmatmul.mubr.f32.gmra.mrb[0].mxu0 %v1840
    %v1842 = vpop.f32.mrb[0].mxu0
    %v1843 = vadd.f32 %v1570, %v1842
    %v1844 = vpop.f32.mrb[0].mxu0
    %1845 = vmatprep.mubr.f32.mxu0 0.0
    %v1846 = vand.u32 %v1404, 4294901760
    %1847 = vmatmul.mubr.f32.gmra.mrb[0].mxu0 %v1846
    %v1848 = vpop.f32.mrb[0].mxu0
    %v1849 = vadd.f32 %v1580, %v1848
    %v1850 = vpop.f32.mrb[0].mxu0
    %1851 = vmatprep.mubr.f32.mxu0 0.0
    %v1852 = vand.u32 %v1405, 4294901760
    %1853 = vmatmul.mubr.f32.gmra.mrb[0].mxu0 %v1852
    %v1854 = vpop.f32.mrb[0].mxu0
    %v1855 = vadd.f32 %v1590, %v1854
    %v1856 = vpop.f32.mrb[0].mxu0
    %1857 = vmatprep.mubr.f32.mxu0 0.0
    %v1858 = vand.u32 %v1406, 4294901760
    %1859 = vmatmul.mubr.f32.gmra.mrb[0].mxu0 %v1858
    %v1860 = vpop.f32.mrb[0].mxu0
    %v1861 = vadd.f32 %v1600, %v1860
    %v1862 = vpop.f32.mrb[0].mxu0
    %1863 = vmatprep.mubr.f32.mxu0 0.0
    %v1864 = vand.u32 %v1407, 4294901760
    %1865 = vmatmul.mubr.f32.gmra.mrb[0].mxu0 %v1864
    %v1866 = vpop.f32.mrb[0].mxu0
    %v1867 = vadd.f32 %v1610, %v1866
    %v1868 = vpop.f32.mrb[0].mxu0
    %1869 = vmatprep.mubr.f32.mxu0 0.0
    %v1870 = vand.u32 %v1408, 4294901760
    %1871 = vmatmul.mubr.f32.gmra.mrb[0].mxu0 %v1870
    %v1872 = vpop.f32.mrb[0].mxu0
    %v1873 = vadd.f32 %v1620, %v1872
    %v1874 = vpop.f32.mrb[0].mxu0
    %1875 = vmatprep.mubr.f32.mxu0 0.0
    %v1876 = vand.u32 %v1409, 4294901760
    %1877 = vmatmul.mubr.f32.gmra.mrb[0].mxu0 %v1876
    %v1878 = vpop.f32.mrb[0].mxu0
    %v1879 = vadd.f32 %v1630, %v1878
    %v1880 = vpop.f32.mrb[0].mxu0
    %1881 = vmatprep.mubr.f32.mxu0 0.0
    %v1882 = vand.u32 %v1410, 4294901760
    %1883 = vmatmul.mubr.f32.gmra.mrb[0].mxu0 %v1882
    %v1884 = vpop.f32.mrb[0].mxu0
    %v1885 = vadd.f32 %v1640, %v1884
    %v1886 = vpop.f32.mrb[0].mxu0
    %1887 = vmatprep.mubr.f32.mxu0 0.0
    %v1888 = vand.u32 %v1411, 4294901760
    %1889 = vmatmul.mubr.f32.gmra.mrb[0].mxu0 %v1888
    %v1890 = vpop.f32.mrb[0].mxu0
    %v1891 = vadd.f32 %v1650, %v1890
    %v1892 = vpop.f32.mrb[0].mxu0
    %1893 = vdwg.mxu0
    %1894 = vmatprep.subr.mxu0 0.0
    %v1895 = vand.u32 %v62, 4294901760
    %v1896 = vsub.f32 %v62, %v1895
    %1897 = vmatpush1.msra.mxu0 %v1896
    %1898 = vmatprep.subr.mxu0 0.0
    %v1899 = vand.u32 %v63, 4294901760
    %v1900 = vsub.f32 %v63, %v1899
    %1901 = vmatpush1.msra.mxu0 %v1900
    %1902 = vmatprep.subr.mxu0 0.0
    %v1903 = vand.u32 %v64, 4294901760
    %v1904 = vsub.f32 %v64, %v1903
    %1905 = vmatpush1.msra.mxu0 %v1904
    %1906 = vmatprep.subr.mxu0 0.0
    %v1907 = vand.u32 %v65, 4294901760
    %v1908 = vsub.f32 %v65, %v1907
    %1909 = vmatpush1.msra.mxu0 %v1908
    %1910 = vmatprep.subr.mxu0 0.0
    %v1911 = vand.u32 %v66, 4294901760
    %v1912 = vsub.f32 %v66, %v1911
    %1913 = vmatpush1.msra.mxu0 %v1912
    %1914 = vmatprep.subr.mxu0 0.0
    %v1915 = vand.u32 %v67, 4294901760
    %v1916 = vsub.f32 %v67, %v1915
    %1917 = vmatpush1.msra.mxu0 %v1916
    %1918 = vmatprep.subr.mxu0 0.0
    %v1919 = vand.u32 %v68, 4294901760
    %v1920 = vsub.f32 %v68, %v1919
    %1921 = vmatpush1.msra.mxu0 %v1920
    %1922 = vmatprep.subr.mxu0 0.0
    %v1923 = vand.u32 %v69, 4294901760
    %v1924 = vsub.f32 %v69, %v1923
    %1925 = vmatpush1.msra.mxu0 %v1924
    %1926 = vmatprep.subr.mxu0 0.0
    %v1927 = vand.u32 %v70, 4294901760
    %v1928 = vsub.f32 %v70, %v1927
    %1929 = vmatpush1.msra.mxu0 %v1928
    %1930 = vmatprep.subr.mxu0 0.0
    %v1931 = vand.u32 %v71, 4294901760
    %v1932 = vsub.f32 %v71, %v1931
    %1933 = vmatpush1.msra.mxu0 %v1932
    %1934 = vmatprep.subr.mxu0 0.0
    %v1935 = vand.u32 %v72, 4294901760
    %v1936 = vsub.f32 %v72, %v1935
    %1937 = vmatpush1.msra.mxu0 %v1936
    %1938 = vmatprep.subr.mxu0 0.0
    %v1939 = vand.u32 %v73, 4294901760
    %v1940 = vsub.f32 %v73, %v1939
    %1941 = vmatpush1.msra.mxu0 %v1940
    %1942 = vmatprep.subr.mxu0 0.0
    %v1943 = vand.u32 %v74, 4294901760
    %v1944 = vsub.f32 %v74, %v1943
    %1945 = vmatpush1.msra.mxu0 %v1944
    %1946 = vmatprep.subr.mxu0 0.0
    %v1947 = vand.u32 %v75, 4294901760
    %v1948 = vsub.f32 %v75, %v1947
    %1949 = vmatpush1.msra.mxu0 %v1948
    %1950 = vmatprep.subr.mxu0 0.0
    %v1951 = vand.u32 %v76, 4294901760
    %v1952 = vsub.f32 %v76, %v1951
    %1953 = vmatpush1.msra.mxu0 %v1952
    %1954 = vmatprep.subr.mxu0 0.0
    %v1955 = vand.u32 %v77, 4294901760
    %v1956 = vsub.f32 %v77, %v1955
    %1957 = vmatpush1.msra.mxu0 %v1956
    %1958 = vmatprep.subr.mxu0 0.0
    %1959 = vmatpush1.msra.mxu0 0.0
    %1960 = vmatprep.subr.mxu0 0.0
    %1961 = vmatpush1.msra.mxu0 0.0
    %1962 = vmatprep.subr.mxu0 0.0
    %1963 = vmatpush1.msra.mxu0 0.0
    %1964 = vmatprep.subr.mxu0 0.0
    %1965 = vmatpush1.msra.mxu0 0.0
    %1966 = vmatprep.subr.mxu0 0.0
    %1967 = vmatpush1.msra.mxu0 0.0
    %1968 = vmatprep.subr.mxu0 0.0
    %1969 = vmatpush1.msra.mxu0 0.0
    %1970 = vmatprep.subr.mxu0 0.0
    %1971 = vmatpush1.msra.mxu0 0.0
    %1972 = vmatprep.subr.mxu0 0.0
    %1973 = vmatpush1.msra.mxu0 0.0
    %1974 = vmatprep.subr.mxu0 0.0
    %1975 = vmatpush1.msra.mxu0 0.0
    %1976 = vmatprep.subr.mxu0 0.0
    %1977 = vmatpush1.msra.mxu0 0.0
    %1978 = vmatprep.subr.mxu0 0.0
    %1979 = vmatpush1.msra.mxu0 0.0
    %1980 = vmatprep.subr.mxu0 0.0
    %1981 = vmatpush1.msra.mxu0 0.0
    %1982 = vmatprep.subr.mxu0 0.0
    %1983 = vmatpush1.msra.mxu0 0.0
    %1984 = vmatprep.subr.mxu0 0.0
    %1985 = vmatpush1.msra.mxu0 0.0
    %1986 = vmatprep.subr.mxu0 0.0
    %1987 = vmatpush1.msra.mxu0 0.0
    %1988 = vmatprep.subr.mxu0 0.0
    %1989 = vmatpush1.msra.mxu0 0.0
    %1990 = vmatprep.mubr.f32.mxu0 0.0
    %v1991 = vand.u32 %v1396, 4294901760
    %v1992 = vsub.f32 %v1396, %v1991
    %1993 = vmatmul.mubr.f32.gmra.mrb[0].mxu0 %v1992
    %v1994 = vpop.f32.mrb[0].mxu0
    %v1995 = vadd.f32 %v1801, %v1994
    %v1996 = vpop.f32.mrb[0].mxu0
    %1997 = vmatprep.mubr.f32.mxu0 0.0
    %v1998 = vand.u32 %v1397, 4294901760
    %v1999 = vsub.f32 %v1397, %v1998
    %2000 = vmatmul.mubr.f32.gmra.mrb[0].mxu0 %v1999
    %v2001 = vpop.f32.mrb[0].mxu0
    %v2002 = vadd.f32 %v1807, %v2001
    %v2003 = vpop.f32.mrb[0].mxu0
    %2004 = vmatprep.mubr.f32.mxu0 0.0
    %v2005 = vand.u32 %v1398, 4294901760
    %v2006 = vsub.f32 %v1398, %v2005
    %2007 = vmatmul.mubr.f32.gmra.mrb[0].mxu0 %v2006
    %v2008 = vpop.f32.mrb[0].mxu0
    %v2009 = vadd.f32 %v1813, %v2008
    %v2010 = vpop.f32.mrb[0].mxu0
    %2011 = vmatprep.mubr.f32.mxu0 0.0
    %v2012 = vand.u32 %v1399, 4294901760
    %v2013 = vsub.f32 %v1399, %v2012
    %2014 = vmatmul.mubr.f32.gmra.mrb[0].mxu0 %v2013
    %v2015 = vpop.f32.mrb[0].mxu0
    %v2016 = vadd.f32 %v1819, %v2015
    %v2017 = vpop.f32.mrb[0].mxu0
    %2018 = vmatprep.mubr.f32.mxu0 0.0
    %v2019 = vand.u32 %v1400, 4294901760
    %v2020 = vsub.f32 %v1400, %v2019
    %2021 = vmatmul.mubr.f32.gmra.mrb[0].mxu0 %v2020
    %v2022 = vpop.f32.mrb[0].mxu0
    %v2023 = vadd.f32 %v1825, %v2022
    %v2024 = vpop.f32.mrb[0].mxu0
    %2025 = vmatprep.mubr.f32.mxu0 0.0
    %v2026 = vand.u32 %v1401, 4294901760
    %v2027 = vsub.f32 %v1401, %v2026
    %2028 = vmatmul.mubr.f32.gmra.mrb[0].mxu0 %v2027
    %v2029 = vpop.f32.mrb[0].mxu0
    %v2030 = vadd.f32 %v1831, %v2029
    %v2031 = vpop.f32.mrb[0].mxu0
    %2032 = vmatprep.mubr.f32.mxu0 0.0
    %v2033 = vand.u32 %v1402, 4294901760
    %v2034 = vsub.f32 %v1402, %v2033
    %2035 = vmatmul.mubr.f32.gmra.mrb[0].mxu0 %v2034
    %v2036 = vpop.f32.mrb[0].mxu0
    %v2037 = vadd.f32 %v1837, %v2036
    %v2038 = vpop.f32.mrb[0].mxu0
    %2039 = vmatprep.mubr.f32.mxu0 0.0
    %v2040 = vand.u32 %v1403, 4294901760
    %v2041 = vsub.f32 %v1403, %v2040
    %2042 = vmatmul.mubr.f32.gmra.mrb[0].mxu0 %v2041
    %v2043 = vpop.f32.mrb[0].mxu0
    %v2044 = vadd.f32 %v1843, %v2043
    %v2045 = vpop.f32.mrb[0].mxu0
    %2046 = vmatprep.mubr.f32.mxu0 0.0
    %v2047 = vand.u32 %v1404, 4294901760
    %v2048 = vsub.f32 %v1404, %v2047
    %2049 = vmatmul.mubr.f32.gmra.mrb[0].mxu0 %v2048
    %v2050 = vpop.f32.mrb[0].mxu0
    %v2051 = vadd.f32 %v1849, %v2050
    %v2052 = vpop.f32.mrb[0].mxu0
    %2053 = vmatprep.mubr.f32.mxu0 0.0
    %v2054 = vand.u32 %v1405, 4294901760
    %v2055 = vsub.f32 %v1405, %v2054
    %2056 = vmatmul.mubr.f32.gmra.mrb[0].mxu0 %v2055
    %v2057 = vpop.f32.mrb[0].mxu0
    %v2058 = vadd.f32 %v1855, %v2057
    %v2059 = vpop.f32.mrb[0].mxu0
    %2060 = vmatprep.mubr.f32.mxu0 0.0
    %v2061 = vand.u32 %v1406, 4294901760
    %v2062 = vsub.f32 %v1406, %v2061
    %2063 = vmatmul.mubr.f32.gmra.mrb[0].mxu0 %v2062
    %v2064 = vpop.f32.mrb[0].mxu0
    %v2065 = vadd.f32 %v1861, %v2064
    %v2066 = vpop.f32.mrb[0].mxu0
    %2067 = vmatprep.mubr.f32.mxu0 0.0
    %v2068 = vand.u32 %v1407, 4294901760
    %v2069 = vsub.f32 %v1407, %v2068
    %2070 = vmatmul.mubr.f32.gmra.mrb[0].mxu0 %v2069
    %v2071 = vpop.f32.mrb[0].mxu0
    %v2072 = vadd.f32 %v1867, %v2071
    %v2073 = vpop.f32.mrb[0].mxu0
    %2074 = vmatprep.mubr.f32.mxu0 0.0
    %v2075 = vand.u32 %v1408, 4294901760
    %v2076 = vsub.f32 %v1408, %v2075
    %2077 = vmatmul.mubr.f32.gmra.mrb[0].mxu0 %v2076
    %v2078 = vpop.f32.mrb[0].mxu0
    %v2079 = vadd.f32 %v1873, %v2078
    %v2080 = vpop.f32.mrb[0].mxu0
    %2081 = vmatprep.mubr.f32.mxu0 0.0
    %v2082 = vand.u32 %v1409, 4294901760
    %v2083 = vsub.f32 %v1409, %v2082
    %2084 = vmatmul.mubr.f32.gmra.mrb[0].mxu0 %v2083
    %v2085 = vpop.f32.mrb[0].mxu0
    %v2086 = vadd.f32 %v1879, %v2085
    %v2087 = vpop.f32.mrb[0].mxu0
    %2088 = vmatprep.mubr.f32.mxu0 0.0
    %v2089 = vand.u32 %v1410, 4294901760
    %v2090 = vsub.f32 %v1410, %v2089
    %2091 = vmatmul.mubr.f32.gmra.mrb[0].mxu0 %v2090
    %v2092 = vpop.f32.mrb[0].mxu0
    %v2093 = vadd.f32 %v1885, %v2092
    %v2094 = vpop.f32.mrb[0].mxu0
    %2095 = vmatprep.mubr.f32.mxu0 0.0
    %v2096 = vand.u32 %v1411, 4294901760
    %v2097 = vsub.f32 %v1411, %v2096
    %2098 = vmatmul.mubr.f32.gmra.mrb[0].mxu0 %v2097
    %v2099 = vpop.f32.mrb[0].mxu0
    %v2100 = vadd.f32 %v1891, %v2099
    %v2101 = vpop.f32.mrb[0].mxu0
    %2102 = vdwg.mxu0
    %2103 = vmatprep.subr.mxu0 0.0
    %v2104 = vand.u32 %v62, 4294901760
    %2105 = vmatpush1.msra.mxu0 %v2104
    %2106 = vmatprep.subr.mxu0 0.0
    %v2107 = vand.u32 %v63, 4294901760
    %2108 = vmatpush1.msra.mxu0 %v2107
    %2109 = vmatprep.subr.mxu0 0.0
    %v2110 = vand.u32 %v64, 4294901760
    %2111 = vmatpush1.msra.mxu0 %v2110
    %2112 = vmatprep.subr.mxu0 0.0
    %v2113 = vand.u32 %v65, 4294901760
    %2114 = vmatpush1.msra.mxu0 %v2113
    %2115 = vmatprep.subr.mxu0 0.0
    %v2116 = vand.u32 %v66, 4294901760
    %2117 = vmatpush1.msra.mxu0 %v2116
    %2118 = vmatprep.subr.mxu0 0.0
    %v2119 = vand.u32 %v67, 4294901760
    %2120 = vmatpush1.msra.mxu0 %v2119
    %2121 = vmatprep.subr.mxu0 0.0
    %v2122 = vand.u32 %v68, 4294901760
    %2123 = vmatpush1.msra.mxu0 %v2122
    %2124 = vmatprep.subr.mxu0 0.0
    %v2125 = vand.u32 %v69, 4294901760
    %2126 = vmatpush1.msra.mxu0 %v2125
    %2127 = vmatprep.subr.mxu0 0.0
    %v2128 = vand.u32 %v70, 4294901760
    %2129 = vmatpush1.msra.mxu0 %v2128
    %2130 = vmatprep.subr.mxu0 0.0
    %v2131 = vand.u32 %v71, 4294901760
    %2132 = vmatpush1.msra.mxu0 %v2131
    %2133 = vmatprep.subr.mxu0 0.0
    %v2134 = vand.u32 %v72, 4294901760
    %2135 = vmatpush1.msra.mxu0 %v2134
    %2136 = vmatprep.subr.mxu0 0.0
    %v2137 = vand.u32 %v73, 4294901760
    %2138 = vmatpush1.msra.mxu0 %v2137
    %2139 = vmatprep.subr.mxu0 0.0
    %v2140 = vand.u32 %v74, 4294901760
    %2141 = vmatpush1.msra.mxu0 %v2140
    %2142 = vmatprep.subr.mxu0 0.0
    %v2143 = vand.u32 %v75, 4294901760
    %2144 = vmatpush1.msra.mxu0 %v2143
    %2145 = vmatprep.subr.mxu0 0.0
    %v2146 = vand.u32 %v76, 4294901760
    %2147 = vmatpush1.msra.mxu0 %v2146
    %2148 = vmatprep.subr.mxu0 0.0
    %v2149 = vand.u32 %v77, 4294901760
    %2150 = vmatpush1.msra.mxu0 %v2149
    %2151 = vmatprep.subr.mxu0 0.0
    %2152 = vmatpush1.msra.mxu0 0.0
    %2153 = vmatprep.subr.mxu0 0.0
    %2154 = vmatpush1.msra.mxu0 0.0
    %2155 = vmatprep.subr.mxu0 0.0
    %2156 = vmatpush1.msra.mxu0 0.0
    %2157 = vmatprep.subr.mxu0 0.0
    %2158 = vmatpush1.msra.mxu0 0.0
    %2159 = vmatprep.subr.mxu0 0.0
    %2160 = vmatpush1.msra.mxu0 0.0
    %2161 = vmatprep.subr.mxu0 0.0
    %2162 = vmatpush1.msra.mxu0 0.0
    %2163 = vmatprep.subr.mxu0 0.0
    %2164 = vmatpush1.msra.mxu0 0.0
    %2165 = vmatprep.subr.mxu0 0.0
    %2166 = vmatpush1.msra.mxu0 0.0
    %2167 = vmatprep.subr.mxu0 0.0
    %2168 = vmatpush1.msra.mxu0 0.0
    %2169 = vmatprep.subr.mxu0 0.0
    %2170 = vmatpush1.msra.mxu0 0.0
    %2171 = vmatprep.subr.mxu0 0.0
    %2172 = vmatpush1.msra.mxu0 0.0
    %2173 = vmatprep.subr.mxu0 0.0
    %2174 = vmatpush1.msra.mxu0 0.0
    %2175 = vmatprep.subr.mxu0 0.0
    %2176 = vmatpush1.msra.mxu0 0.0
    %2177 = vmatprep.subr.mxu0 0.0
    %2178 = vmatpush1.msra.mxu0 0.0
    %2179 = vmatprep.subr.mxu0 0.0
    %2180 = vmatpush1.msra.mxu0 0.0
    %2181 = vmatprep.subr.mxu0 0.0
    %2182 = vmatpush1.msra.mxu0 0.0
    %2183 = vmatprep.mubr.f32.mxu0 0.0
    %v2184 = vand.u32 %v1396, 4294901760
    %v2185 = vsub.f32 %v1396, %v2184
    %v2186 = vand.u32 %v2185, 4294901760
    %2187 = vmatmul.mubr.f32.gmra.mrb[0].mxu0 %v2186
    %v2188 = vpop.f32.mrb[0].mxu0
    %v2189 = vadd.f32 %v1995, %v2188
    %v2190 = vpop.f32.mrb[0].mxu0
    %2191 = vmatprep.mubr.f32.mxu0 0.0
    %v2192 = vand.u32 %v1397, 4294901760
    %v2193 = vsub.f32 %v1397, %v2192
    %v2194 = vand.u32 %v2193, 4294901760
    %2195 = vmatmul.mubr.f32.gmra.mrb[0].mxu0 %v2194
    %v2196 = vpop.f32.mrb[0].mxu0
    %v2197 = vadd.f32 %v2002, %v2196
    %v2198 = vpop.f32.mrb[0].mxu0
    %2199 = vmatprep.mubr.f32.mxu0 0.0
    %v2200 = vand.u32 %v1398, 4294901760
    %v2201 = vsub.f32 %v1398, %v2200
    %v2202 = vand.u32 %v2201, 4294901760
    %2203 = vmatmul.mubr.f32.gmra.mrb[0].mxu0 %v2202
    %v2204 = vpop.f32.mrb[0].mxu0
    %v2205 = vadd.f32 %v2009, %v2204
    %v2206 = vpop.f32.mrb[0].mxu0
    %2207 = vmatprep.mubr.f32.mxu0 0.0
    %v2208 = vand.u32 %v1399, 4294901760
    %v2209 = vsub.f32 %v1399, %v2208
    %v2210 = vand.u32 %v2209, 4294901760
    %2211 = vmatmul.mubr.f32.gmra.mrb[0].mxu0 %v2210
    %v2212 = vpop.f32.mrb[0].mxu0
    %v2213 = vadd.f32 %v2016, %v2212
    %v2214 = vpop.f32.mrb[0].mxu0
    %2215 = vmatprep.mubr.f32.mxu0 0.0
    %v2216 = vand.u32 %v1400, 4294901760
    %v2217 = vsub.f32 %v1400, %v2216
    %v2218 = vand.u32 %v2217, 4294901760
    %2219 = vmatmul.mubr.f32.gmra.mrb[0].mxu0 %v2218
    %v2220 = vpop.f32.mrb[0].mxu0
    %v2221 = vadd.f32 %v2023, %v2220
    %v2222 = vpop.f32.mrb[0].mxu0
    %2223 = vmatprep.mubr.f32.mxu0 0.0
    %v2224 = vand.u32 %v1401, 4294901760
    %v2225 = vsub.f32 %v1401, %v2224
    %v2226 = vand.u32 %v2225, 4294901760
    %2227 = vmatmul.mubr.f32.gmra.mrb[0].mxu0 %v2226
    %v2228 = vpop.f32.mrb[0].mxu0
    %v2229 = vadd.f32 %v2030, %v2228
    %v2230 = vpop.f32.mrb[0].mxu0
    %2231 = vmatprep.mubr.f32.mxu0 0.0
    %v2232 = vand.u32 %v1402, 4294901760
    %v2233 = vsub.f32 %v1402, %v2232
    %v2234 = vand.u32 %v2233, 4294901760
    %2235 = vmatmul.mubr.f32.gmra.mrb[0].mxu0 %v2234
    %v2236 = vpop.f32.mrb[0].mxu0
    %v2237 = vadd.f32 %v2037, %v2236
    %v2238 = vpop.f32.mrb[0].mxu0
    %2239 = vmatprep.mubr.f32.mxu0 0.0
    %v2240 = vand.u32 %v1403, 4294901760
    %v2241 = vsub.f32 %v1403, %v2240
    %v2242 = vand.u32 %v2241, 4294901760
    %2243 = vmatmul.mubr.f32.gmra.mrb[0].mxu0 %v2242
    %v2244 = vpop.f32.mrb[0].mxu0
    %v2245 = vadd.f32 %v2044, %v2244
    %v2246 = vpop.f32.mrb[0].mxu0
    %2247 = vmatprep.mubr.f32.mxu0 0.0
    %v2248 = vand.u32 %v1404, 4294901760
    %v2249 = vsub.f32 %v1404, %v2248
    %v2250 = vand.u32 %v2249, 4294901760
    %2251 = vmatmul.mubr.f32.gmra.mrb[0].mxu0 %v2250
    %v2252 = vpop.f32.mrb[0].mxu0
    %v2253 = vadd.f32 %v2051, %v2252
    %v2254 = vpop.f32.mrb[0].mxu0
    %2255 = vmatprep.mubr.f32.mxu0 0.0
    %v2256 = vand.u32 %v1405, 4294901760
    %v2257 = vsub.f32 %v1405, %v2256
    %v2258 = vand.u32 %v2257, 4294901760
    %2259 = vmatmul.mubr.f32.gmra.mrb[0].mxu0 %v2258
    %v2260 = vpop.f32.mrb[0].mxu0
    %v2261 = vadd.f32 %v2058, %v2260
    %v2262 = vpop.f32.mrb[0].mxu0
    %2263 = vmatprep.mubr.f32.mxu0 0.0
    %v2264 = vand.u32 %v1406, 4294901760
    %v2265 = vsub.f32 %v1406, %v2264
    %v2266 = vand.u32 %v2265, 4294901760
    %2267 = vmatmul.mubr.f32.gmra.mrb[0].mxu0 %v2266
    %v2268 = vpop.f32.mrb[0].mxu0
    %v2269 = vadd.f32 %v2065, %v2268
    %v2270 = vpop.f32.mrb[0].mxu0
    %2271 = vmatprep.mubr.f32.mxu0 0.0
    %v2272 = vand.u32 %v1407, 4294901760
    %v2273 = vsub.f32 %v1407, %v2272
    %v2274 = vand.u32 %v2273, 4294901760
    %2275 = vmatmul.mubr.f32.gmra.mrb[0].mxu0 %v2274
    %v2276 = vpop.f32.mrb[0].mxu0
    %v2277 = vadd.f32 %v2072, %v2276
    %v2278 = vpop.f32.mrb[0].mxu0
    %2279 = vmatprep.mubr.f32.mxu0 0.0
    %v2280 = vand.u32 %v1408, 4294901760
    %v2281 = vsub.f32 %v1408, %v2280
    %v2282 = vand.u32 %v2281, 4294901760
    %2283 = vmatmul.mubr.f32.gmra.mrb[0].mxu0 %v2282
    %v2284 = vpop.f32.mrb[0].mxu0
    %v2285 = vadd.f32 %v2079, %v2284
    %v2286 = vpop.f32.mrb[0].mxu0
    %2287 = vmatprep.mubr.f32.mxu0 0.0
    %v2288 = vand.u32 %v1409, 4294901760
    %v2289 = vsub.f32 %v1409, %v2288
    %v2290 = vand.u32 %v2289, 4294901760
    %2291 = vmatmul.mubr.f32.gmra.mrb[0].mxu0 %v2290
    %v2292 = vpop.f32.mrb[0].mxu0
    %v2293 = vadd.f32 %v2086, %v2292
    %v2294 = vpop.f32.mrb[0].mxu0
    %2295 = vmatprep.mubr.f32.mxu0 0.0
    %v2296 = vand.u32 %v1410, 4294901760
    %v2297 = vsub.f32 %v1410, %v2296
    %v2298 = vand.u32 %v2297, 4294901760
    %2299 = vmatmul.mubr.f32.gmra.mrb[0].mxu0 %v2298
    %v2300 = vpop.f32.mrb[0].mxu0
    %v2301 = vadd.f32 %v2093, %v2300
    %v2302 = vpop.f32.mrb[0].mxu0
    %2303 = vmatprep.mubr.f32.mxu0 0.0
    %v2304 = vand.u32 %v1411, 4294901760
    %v2305 = vsub.f32 %v1411, %v2304
    %v2306 = vand.u32 %v2305, 4294901760
    %2307 = vmatmul.mubr.f32.gmra.mrb[0].mxu0 %v2306
    %v2308 = vpop.f32.mrb[0].mxu0
    %v2309 = vadd.f32 %v2100, %v2308
    %v2310 = vpop.f32.mrb[0].mxu0
    %2311 = vdwg.mxu0
    %2312 = vmatprep.subr.mxu0 0.0
    %v2313 = vand.u32 %v62, 4294901760
    %v2314 = vsub.f32 %v62, %v2313
    %v2315 = vand.u32 %v2314, 4294901760
    %2316 = vmatpush1.msra.mxu0 %v2315
    %2317 = vmatprep.subr.mxu0 0.0
    %v2318 = vand.u32 %v63, 4294901760
    %v2319 = vsub.f32 %v63, %v2318
    %v2320 = vand.u32 %v2319, 4294901760
    %2321 = vmatpush1.msra.mxu0 %v2320
    %2322 = vmatprep.subr.mxu0 0.0
    %v2323 = vand.u32 %v64, 4294901760
    %v2324 = vsub.f32 %v64, %v2323
    %v2325 = vand.u32 %v2324, 4294901760
    %2326 = vmatpush1.msra.mxu0 %v2325
    %2327 = vmatprep.subr.mxu0 0.0
    %v2328 = vand.u32 %v65, 4294901760
    %v2329 = vsub.f32 %v65, %v2328
    %v2330 = vand.u32 %v2329, 4294901760
    %2331 = vmatpush1.msra.mxu0 %v2330
    %2332 = vmatprep.subr.mxu0 0.0
    %v2333 = vand.u32 %v66, 4294901760
    %v2334 = vsub.f32 %v66, %v2333
    %v2335 = vand.u32 %v2334, 4294901760
    %2336 = vmatpush1.msra.mxu0 %v2335
    %2337 = vmatprep.subr.mxu0 0.0
    %v2338 = vand.u32 %v67, 4294901760
    %v2339 = vsub.f32 %v67, %v2338
    %v2340 = vand.u32 %v2339, 4294901760
    %2341 = vmatpush1.msra.mxu0 %v2340
    %2342 = vmatprep.subr.mxu0 0.0
    %v2343 = vand.u32 %v68, 4294901760
    %v2344 = vsub.f32 %v68, %v2343
    %v2345 = vand.u32 %v2344, 4294901760
    %2346 = vmatpush1.msra.mxu0 %v2345
    %2347 = vmatprep.subr.mxu0 0.0
    %v2348 = vand.u32 %v69, 4294901760
    %v2349 = vsub.f32 %v69, %v2348
    %v2350 = vand.u32 %v2349, 4294901760
    %2351 = vmatpush1.msra.mxu0 %v2350
    %2352 = vmatprep.subr.mxu0 0.0
    %v2353 = vand.u32 %v70, 4294901760
    %v2354 = vsub.f32 %v70, %v2353
    %v2355 = vand.u32 %v2354, 4294901760
    %2356 = vmatpush1.msra.mxu0 %v2355
    %2357 = vmatprep.subr.mxu0 0.0
    %v2358 = vand.u32 %v71, 4294901760
    %v2359 = vsub.f32 %v71, %v2358
    %v2360 = vand.u32 %v2359, 4294901760
    %2361 = vmatpush1.msra.mxu0 %v2360
    %2362 = vmatprep.subr.mxu0 0.0
    %v2363 = vand.u32 %v72, 4294901760
    %v2364 = vsub.f32 %v72, %v2363
    %v2365 = vand.u32 %v2364, 4294901760
    %2366 = vmatpush1.msra.mxu0 %v2365
    %2367 = vmatprep.subr.mxu0 0.0
    %v2368 = vand.u32 %v73, 4294901760
    %v2369 = vsub.f32 %v73, %v2368
    %v2370 = vand.u32 %v2369, 4294901760
    %2371 = vmatpush1.msra.mxu0 %v2370
    %2372 = vmatprep.subr.mxu0 0.0
    %v2373 = vand.u32 %v74, 4294901760
    %v2374 = vsub.f32 %v74, %v2373
    %v2375 = vand.u32 %v2374, 4294901760
    %2376 = vmatpush1.msra.mxu0 %v2375
    %2377 = vmatprep.subr.mxu0 0.0
    %v2378 = vand.u32 %v75, 4294901760
    %v2379 = vsub.f32 %v75, %v2378
    %v2380 = vand.u32 %v2379, 4294901760
    %2381 = vmatpush1.msra.mxu0 %v2380
    %2382 = vmatprep.subr.mxu0 0.0
    %v2383 = vand.u32 %v76, 4294901760
    %v2384 = vsub.f32 %v76, %v2383
    %v2385 = vand.u32 %v2384, 4294901760
    %2386 = vmatpush1.msra.mxu0 %v2385
    %2387 = vmatprep.subr.mxu0 0.0
    %v2388 = vand.u32 %v77, 4294901760
    %v2389 = vsub.f32 %v77, %v2388
    %v2390 = vand.u32 %v2389, 4294901760
    %2391 = vmatpush1.msra.mxu0 %v2390
    %2392 = vmatprep.subr.mxu0 0.0
    %2393 = vmatpush1.msra.mxu0 0.0
    %2394 = vmatprep.subr.mxu0 0.0
    %2395 = vmatpush1.msra.mxu0 0.0
    %2396 = vmatprep.subr.mxu0 0.0
    %2397 = vmatpush1.msra.mxu0 0.0
    %2398 = vmatprep.subr.mxu0 0.0
    %2399 = vmatpush1.msra.mxu0 0.0
    %2400 = vmatprep.subr.mxu0 0.0
    %2401 = vmatpush1.msra.mxu0 0.0
    %2402 = vmatprep.subr.mxu0 0.0
    %2403 = vmatpush1.msra.mxu0 0.0
    %2404 = vmatprep.subr.mxu0 0.0
    %2405 = vmatpush1.msra.mxu0 0.0
    %2406 = vmatprep.subr.mxu0 0.0
    %2407 = vmatpush1.msra.mxu0 0.0
    %2408 = vmatprep.subr.mxu0 0.0
    %2409 = vmatpush1.msra.mxu0 0.0
    %2410 = vmatprep.subr.mxu0 0.0
    %2411 = vmatpush1.msra.mxu0 0.0
    %2412 = vmatprep.subr.mxu0 0.0
    %2413 = vmatpush1.msra.mxu0 0.0
    %2414 = vmatprep.subr.mxu0 0.0
    %2415 = vmatpush1.msra.mxu0 0.0
    %2416 = vmatprep.subr.mxu0 0.0
    %2417 = vmatpush1.msra.mxu0 0.0
    %2418 = vmatprep.subr.mxu0 0.0
    %2419 = vmatpush1.msra.mxu0 0.0
    %2420 = vmatprep.subr.mxu0 0.0
    %2421 = vmatpush1.msra.mxu0 0.0
    %2422 = vmatprep.subr.mxu0 0.0
    %2423 = vmatpush1.msra.mxu0 0.0
    %2424 = vmatprep.mubr.f32.mxu0 0.0
    %v2425 = vand.u32 %v1396, 4294901760
    %2426 = vmatmul.mubr.f32.gmra.mrb[0].mxu0 %v2425
    %v2427 = vpop.f32.mrb[0].mxu0
    %v2428 = vadd.f32 %v2189, %v2427
    %v2429 = vpop.f32.mrb[0].mxu0
    %2430 = vmatprep.mubr.f32.mxu0 0.0
    %v2431 = vand.u32 %v1397, 4294901760
    %2432 = vmatmul.mubr.f32.gmra.mrb[0].mxu0 %v2431
    %v2433 = vpop.f32.mrb[0].mxu0
    %v2434 = vadd.f32 %v2197, %v2433
    %v2435 = vpop.f32.mrb[0].mxu0
    %2436 = vmatprep.mubr.f32.mxu0 0.0
    %v2437 = vand.u32 %v1398, 4294901760
    %2438 = vmatmul.mubr.f32.gmra.mrb[0].mxu0 %v2437
    %v2439 = vpop.f32.mrb[0].mxu0
    %v2440 = vadd.f32 %v2205, %v2439
    %v2441 = vpop.f32.mrb[0].mxu0
    %2442 = vmatprep.mubr.f32.mxu0 0.0
    %v2443 = vand.u32 %v1399, 4294901760
    %2444 = vmatmul.mubr.f32.gmra.mrb[0].mxu0 %v2443
    %v2445 = vpop.f32.mrb[0].mxu0
    %v2446 = vadd.f32 %v2213, %v2445
    %v2447 = vpop.f32.mrb[0].mxu0
    %2448 = vmatprep.mubr.f32.mxu0 0.0
    %v2449 = vand.u32 %v1400, 4294901760
    %2450 = vmatmul.mubr.f32.gmra.mrb[0].mxu0 %v2449
    %v2451 = vpop.f32.mrb[0].mxu0
    %v2452 = vadd.f32 %v2221, %v2451
    %v2453 = vpop.f32.mrb[0].mxu0
    %2454 = vmatprep.mubr.f32.mxu0 0.0
    %v2455 = vand.u32 %v1401, 4294901760
    %2456 = vmatmul.mubr.f32.gmra.mrb[0].mxu0 %v2455
    %v2457 = vpop.f32.mrb[0].mxu0
    %v2458 = vadd.f32 %v2229, %v2457
    %v2459 = vpop.f32.mrb[0].mxu0
    %2460 = vmatprep.mubr.f32.mxu0 0.0
    %v2461 = vand.u32 %v1402, 4294901760
    %2462 = vmatmul.mubr.f32.gmra.mrb[0].mxu0 %v2461
    %v2463 = vpop.f32.mrb[0].mxu0
    %v2464 = vadd.f32 %v2237, %v2463
    %v2465 = vpop.f32.mrb[0].mxu0
    %2466 = vmatprep.mubr.f32.mxu0 0.0
    %v2467 = vand.u32 %v1403, 4294901760
    %2468 = vmatmul.mubr.f32.gmra.mrb[0].mxu0 %v2467
    %v2469 = vpop.f32.mrb[0].mxu0
    %v2470 = vadd.f32 %v2245, %v2469
    %v2471 = vpop.f32.mrb[0].mxu0
    %2472 = vmatprep.mubr.f32.mxu0 0.0
    %v2473 = vand.u32 %v1404, 4294901760
    %2474 = vmatmul.mubr.f32.gmra.mrb[0].mxu0 %v2473
    %v2475 = vpop.f32.mrb[0].mxu0
    %v2476 = vadd.f32 %v2253, %v2475
    %v2477 = vpop.f32.mrb[0].mxu0
    %2478 = vmatprep.mubr.f32.mxu0 0.0
    %v2479 = vand.u32 %v1405, 4294901760
    %2480 = vmatmul.mubr.f32.gmra.mrb[0].mxu0 %v2479
    %v2481 = vpop.f32.mrb[0].mxu0
    %v2482 = vadd.f32 %v2261, %v2481
    %v2483 = vpop.f32.mrb[0].mxu0
    %2484 = vmatprep.mubr.f32.mxu0 0.0
    %v2485 = vand.u32 %v1406, 4294901760
    %2486 = vmatmul.mubr.f32.gmra.mrb[0].mxu0 %v2485
    %v2487 = vpop.f32.mrb[0].mxu0
    %v2488 = vadd.f32 %v2269, %v2487
    %v2489 = vpop.f32.mrb[0].mxu0
    %2490 = vmatprep.mubr.f32.mxu0 0.0
    %v2491 = vand.u32 %v1407, 4294901760
    %2492 = vmatmul.mubr.f32.gmra.mrb[0].mxu0 %v2491
    %v2493 = vpop.f32.mrb[0].mxu0
    %v2494 = vadd.f32 %v2277, %v2493
    %v2495 = vpop.f32.mrb[0].mxu0
    %2496 = vmatprep.mubr.f32.mxu0 0.0
    %v2497 = vand.u32 %v1408, 4294901760
    %2498 = vmatmul.mubr.f32.gmra.mrb[0].mxu0 %v2497
    %v2499 = vpop.f32.mrb[0].mxu0
    %v2500 = vadd.f32 %v2285, %v2499
    %v2501 = vpop.f32.mrb[0].mxu0
    %2502 = vmatprep.mubr.f32.mxu0 0.0
    %v2503 = vand.u32 %v1409, 4294901760
    %2504 = vmatmul.mubr.f32.gmra.mrb[0].mxu0 %v2503
    %v2505 = vpop.f32.mrb[0].mxu0
    %v2506 = vadd.f32 %v2293, %v2505
    %v2507 = vpop.f32.mrb[0].mxu0
    %2508 = vmatprep.mubr.f32.mxu0 0.0
    %v2509 = vand.u32 %v1410, 4294901760
    %2510 = vmatmul.mubr.f32.gmra.mrb[0].mxu0 %v2509
    %v2511 = vpop.f32.mrb[0].mxu0
    %v2512 = vadd.f32 %v2301, %v2511
    %v2513 = vpop.f32.mrb[0].mxu0
    %2514 = vmatprep.mubr.f32.mxu0 0.0
    %v2515 = vand.u32 %v1411, 4294901760
    %2516 = vmatmul.mubr.f32.gmra.mrb[0].mxu0 %v2515
    %v2517 = vpop.f32.mrb[0].mxu0
    %v2518 = vadd.f32 %v2309, %v2517
    %v2519 = vpop.f32.mrb[0].mxu0
    %2520 = vdwg.mxu0
    %2521 = vmatprep.subr.mxu0 0.0
    %v2522 = vand.u32 %v62, 4294901760
    %2523 = vmatpush1.msra.mxu0 %v2522
    %2524 = vmatprep.subr.mxu0 0.0
    %v2525 = vand.u32 %v63, 4294901760
    %2526 = vmatpush1.msra.mxu0 %v2525
    %2527 = vmatprep.subr.mxu0 0.0
    %v2528 = vand.u32 %v64, 4294901760
    %2529 = vmatpush1.msra.mxu0 %v2528
    %2530 = vmatprep.subr.mxu0 0.0
    %v2531 = vand.u32 %v65, 4294901760
    %2532 = vmatpush1.msra.mxu0 %v2531
    %2533 = vmatprep.subr.mxu0 0.0
    %v2534 = vand.u32 %v66, 4294901760
    %2535 = vmatpush1.msra.mxu0 %v2534
    %2536 = vmatprep.subr.mxu0 0.0
    %v2537 = vand.u32 %v67, 4294901760
    %2538 = vmatpush1.msra.mxu0 %v2537
    %2539 = vmatprep.subr.mxu0 0.0
    %v2540 = vand.u32 %v68, 4294901760
    %2541 = vmatpush1.msra.mxu0 %v2540
    %2542 = vmatprep.subr.mxu0 0.0
    %v2543 = vand.u32 %v69, 4294901760
    %2544 = vmatpush1.msra.mxu0 %v2543
    %2545 = vmatprep.subr.mxu0 0.0
    %v2546 = vand.u32 %v70, 4294901760
    %2547 = vmatpush1.msra.mxu0 %v2546
    %2548 = vmatprep.subr.mxu0 0.0
    %v2549 = vand.u32 %v71, 4294901760
    %2550 = vmatpush1.msra.mxu0 %v2549
    %2551 = vmatprep.subr.mxu0 0.0
    %v2552 = vand.u32 %v72, 4294901760
    %2553 = vmatpush1.msra.mxu0 %v2552
    %2554 = vmatprep.subr.mxu0 0.0
    %v2555 = vand.u32 %v73, 4294901760
    %2556 = vmatpush1.msra.mxu0 %v2555
    %2557 = vmatprep.subr.mxu0 0.0
    %v2558 = vand.u32 %v74, 4294901760
    %2559 = vmatpush1.msra.mxu0 %v2558
    %2560 = vmatprep.subr.mxu0 0.0
    %v2561 = vand.u32 %v75, 4294901760
    %2562 = vmatpush1.msra.mxu0 %v2561
    %2563 = vmatprep.subr.mxu0 0.0
    %v2564 = vand.u32 %v76, 4294901760
    %2565 = vmatpush1.msra.mxu0 %v2564
    %2566 = vmatprep.subr.mxu0 0.0
    %v2567 = vand.u32 %v77, 4294901760
    %2568 = vmatpush1.msra.mxu0 %v2567
    %2569 = vmatprep.subr.mxu0 0.0
    %2570 = vmatpush1.msra.mxu0 0.0
    %2571 = vmatprep.subr.mxu0 0.0
    %2572 = vmatpush1.msra.mxu0 0.0
    %2573 = vmatprep.subr.mxu0 0.0
    %2574 = vmatpush1.msra.mxu0 0.0
    %2575 = vmatprep.subr.mxu0 0.0
    %2576 = vmatpush1.msra.mxu0 0.0
    %2577 = vmatprep.subr.mxu0 0.0
    %2578 = vmatpush1.msra.mxu0 0.0
    %2579 = vmatprep.subr.mxu0 0.0
    %2580 = vmatpush1.msra.mxu0 0.0
    %2581 = vmatprep.subr.mxu0 0.0
    %2582 = vmatpush1.msra.mxu0 0.0
    %2583 = vmatprep.subr.mxu0 0.0
    %2584 = vmatpush1.msra.mxu0 0.0
    %2585 = vmatprep.subr.mxu0 0.0
    %2586 = vmatpush1.msra.mxu0 0.0
    %2587 = vmatprep.subr.mxu0 0.0
    %2588 = vmatpush1.msra.mxu0 0.0
    %2589 = vmatprep.subr.mxu0 0.0
    %2590 = vmatpush1.msra.mxu0 0.0
    %2591 = vmatprep.subr.mxu0 0.0
    %2592 = vmatpush1.msra.mxu0 0.0
    %2593 = vmatprep.subr.mxu0 0.0
    %2594 = vmatpush1.msra.mxu0 0.0
    %2595 = vmatprep.subr.mxu0 0.0
    %2596 = vmatpush1.msra.mxu0 0.0
    %2597 = vmatprep.subr.mxu0 0.0
    %2598 = vmatpush1.msra.mxu0 0.0
    %2599 = vmatprep.subr.mxu0 0.0
    %2600 = vmatpush1.msra.mxu0 0.0
    %2601 = vmatprep.mubr.f32.mxu0 0.0
    %v2602 = vand.u32 %v1396, 4294901760
    %2603 = vmatmul.mubr.f32.gmra.mrb[0].mxu0 %v2602
    %v2604 = vpop.f32.mrb[0].mxu0
    %v2605 = vadd.f32 %v2428, %v2604
    %v2606 = vpop.f32.mrb[0].mxu0
    %2607 = vmatprep.mubr.f32.mxu0 0.0
    %v2608 = vand.u32 %v1397, 4294901760
    %2609 = vmatmul.mubr.f32.gmra.mrb[0].mxu0 %v2608
    %v2610 = vpop.f32.mrb[0].mxu0
    %v2611 = vadd.f32 %v2434, %v2610
    %v2612 = vpop.f32.mrb[0].mxu0
    %2613 = vmatprep.mubr.f32.mxu0 0.0
    %v2614 = vand.u32 %v1398, 4294901760
    %2615 = vmatmul.mubr.f32.gmra.mrb[0].mxu0 %v2614
    %v2616 = vpop.f32.mrb[0].mxu0
    %v2617 = vadd.f32 %v2440, %v2616
    %v2618 = vpop.f32.mrb[0].mxu0
    %2619 = vmatprep.mubr.f32.mxu0 0.0
    %v2620 = vand.u32 %v1399, 4294901760
    %2621 = vmatmul.mubr.f32.gmra.mrb[0].mxu0 %v2620
    %v2622 = vpop.f32.mrb[0].mxu0
    %v2623 = vadd.f32 %v2446, %v2622
    %v2624 = vpop.f32.mrb[0].mxu0
    %2625 = vmatprep.mubr.f32.mxu0 0.0
    %v2626 = vand.u32 %v1400, 4294901760
    %2627 = vmatmul.mubr.f32.gmra.mrb[0].mxu0 %v2626
    %v2628 = vpop.f32.mrb[0].mxu0
    %v2629 = vadd.f32 %v2452, %v2628
    %v2630 = vpop.f32.mrb[0].mxu0
    %2631 = vmatprep.mubr.f32.mxu0 0.0
    %v2632 = vand.u32 %v1401, 4294901760
    %2633 = vmatmul.mubr.f32.gmra.mrb[0].mxu0 %v2632
    %v2634 = vpop.f32.mrb[0].mxu0
    %v2635 = vadd.f32 %v2458, %v2634
    %v2636 = vpop.f32.mrb[0].mxu0
    %2637 = vmatprep.mubr.f32.mxu0 0.0
    %v2638 = vand.u32 %v1402, 4294901760
    %2639 = vmatmul.mubr.f32.gmra.mrb[0].mxu0 %v2638
    %v2640 = vpop.f32.mrb[0].mxu0
    %v2641 = vadd.f32 %v2464, %v2640
    %v2642 = vpop.f32.mrb[0].mxu0
    %2643 = vmatprep.mubr.f32.mxu0 0.0
    %v2644 = vand.u32 %v1403, 4294901760
    %2645 = vmatmul.mubr.f32.gmra.mrb[0].mxu0 %v2644
    %v2646 = vpop.f32.mrb[0].mxu0
    %v2647 = vadd.f32 %v2470, %v2646
    %v2648 = vpop.f32.mrb[0].mxu0
    %2649 = vmatprep.mubr.f32.mxu0 0.0
    %v2650 = vand.u32 %v1404, 4294901760
    %2651 = vmatmul.mubr.f32.gmra.mrb[0].mxu0 %v2650
    %v2652 = vpop.f32.mrb[0].mxu0
    %v2653 = vadd.f32 %v2476, %v2652
    %v2654 = vpop.f32.mrb[0].mxu0
    %2655 = vmatprep.mubr.f32.mxu0 0.0
    %v2656 = vand.u32 %v1405, 4294901760
    %2657 = vmatmul.mubr.f32.gmra.mrb[0].mxu0 %v2656
    %v2658 = vpop.f32.mrb[0].mxu0
    %v2659 = vadd.f32 %v2482, %v2658
    %v2660 = vpop.f32.mrb[0].mxu0
    %2661 = vmatprep.mubr.f32.mxu0 0.0
    %v2662 = vand.u32 %v1406, 4294901760
    %2663 = vmatmul.mubr.f32.gmra.mrb[0].mxu0 %v2662
    %v2664 = vpop.f32.mrb[0].mxu0
    %v2665 = vadd.f32 %v2488, %v2664
    %v2666 = vpop.f32.mrb[0].mxu0
    %2667 = vmatprep.mubr.f32.mxu0 0.0
    %v2668 = vand.u32 %v1407, 4294901760
    %2669 = vmatmul.mubr.f32.gmra.mrb[0].mxu0 %v2668
    %v2670 = vpop.f32.mrb[0].mxu0
    %v2671 = vadd.f32 %v2494, %v2670
    %v2672 = vpop.f32.mrb[0].mxu0
    %2673 = vmatprep.mubr.f32.mxu0 0.0
    %v2674 = vand.u32 %v1408, 4294901760
    %2675 = vmatmul.mubr.f32.gmra.mrb[0].mxu0 %v2674
    %v2676 = vpop.f32.mrb[0].mxu0
    %v2677 = vadd.f32 %v2500, %v2676
    %v2678 = vpop.f32.mrb[0].mxu0
    %2679 = vmatprep.mubr.f32.mxu0 0.0
    %v2680 = vand.u32 %v1409, 4294901760
    %2681 = vmatmul.mubr.f32.gmra.mrb[0].mxu0 %v2680
    %v2682 = vpop.f32.mrb[0].mxu0
    %v2683 = vadd.f32 %v2506, %v2682
    %v2684 = vpop.f32.mrb[0].mxu0
    %2685 = vmatprep.mubr.f32.mxu0 0.0
    %v2686 = vand.u32 %v1410, 4294901760
    %2687 = vmatmul.mubr.f32.gmra.mrb[0].mxu0 %v2686
    %v2688 = vpop.f32.mrb[0].mxu0
    %v2689 = vadd.f32 %v2512, %v2688
    %v2690 = vpop.f32.mrb[0].mxu0
    %2691 = vmatprep.mubr.f32.mxu0 0.0
    %v2692 = vand.u32 %v1411, 4294901760
    %2693 = vmatmul.mubr.f32.gmra.mrb[0].mxu0 %v2692
    %v2694 = vpop.f32.mrb[0].mxu0
    %v2695 = vadd.f32 %v2518, %v2694
    %v2696 = vpop.f32.mrb[0].mxu0
    %2697 = vdwg.mxu0
    %v2698 = vmul.f32 %v2605, 0.03125
    %v2699 = vmul.f32 %v2611, 0.03125
    %v2700 = vmul.f32 %v2617, 0.03125
    %v2701 = vmul.f32 %v2623, 0.03125
    %v2702 = vmul.f32 %v2629, 0.03125
    %v2703 = vmul.f32 %v2635, 0.03125
    %v2704 = vmul.f32 %v2641, 0.03125
    %v2705 = vmul.f32 %v2647, 0.03125
    %v2706 = vmul.f32 %v2653, 0.03125
    %v2707 = vmul.f32 %v2659, 0.03125
    %v2708 = vmul.f32 %v2665, 0.03125
    %v2709 = vmul.f32 %v2671, 0.03125
    %v2710 = vmul.f32 %v2677, 0.03125
    %v2711 = vmul.f32 %v2683, 0.03125
    %v2712 = vmul.f32 %v2689, 0.03125
    %v2713 = vmul.f32 %v2695, 0.03125
    %v2714 = vadd.f32 %v2698, 1e-05
    %v2715 = vadd.f32 %v2699, 1e-05
    %v2716 = vadd.f32 %v2700, 1e-05
    %v2717 = vadd.f32 %v2701, 1e-05
    %v2718 = vadd.f32 %v2702, 1e-05
    %v2719 = vadd.f32 %v2703, 1e-05
    %v2720 = vadd.f32 %v2704, 1e-05
    %v2721 = vadd.f32 %v2705, 1e-05
    %v2722 = vadd.f32 %v2706, 1e-05
    %v2723 = vadd.f32 %v2707, 1e-05
    %v2724 = vadd.f32 %v2708, 1e-05
    %v2725 = vadd.f32 %v2709, 1e-05
    %v2726 = vadd.f32 %v2710, 1e-05
    %v2727 = vadd.f32 %v2711, 1e-05
    %v2728 = vadd.f32 %v2712, 1e-05
    %v2729 = vadd.f32 %v2713, 1e-05
    %v2730 = vrsqrt.pop %v2714
    %v2731 = vrsqrt.pop %v2715
    %v2732 = vrsqrt.pop %v2716
    %v2733 = vrsqrt.pop %v2717
    %v2734 = vrsqrt.pop %v2718
    %v2735 = vrsqrt.pop %v2719
    %v2736 = vrsqrt.pop %v2720
    %v2737 = vrsqrt.pop %v2721
    %v2738 = vrsqrt.pop %v2722
    %v2739 = vrsqrt.pop %v2723
    %v2740 = vrsqrt.pop %v2724
    %v2741 = vrsqrt.pop %v2725
    %v2742 = vrsqrt.pop %v2726
    %v2743 = vrsqrt.pop %v2727
    %v2744 = vrsqrt.pop %v2728
    %v2745 = vrsqrt.pop %v2729
    %v2746 = vmul.f32 %v1380, %v2730
    %v2747 = vmul.f32 %v1381, %v2731
    %v2748 = vmul.f32 %v1382, %v2732
    %v2749 = vmul.f32 %v1383, %v2733
    %v2750 = vmul.f32 %v1384, %v2734
    %v2751 = vmul.f32 %v1385, %v2735
    %v2752 = vmul.f32 %v1386, %v2736
    %v2753 = vmul.f32 %v1387, %v2737
    %v2754 = vmul.f32 %v1388, %v2738
    %v2755 = vmul.f32 %v1389, %v2739
    %v2756 = vmul.f32 %v1390, %v2740
    %v2757 = vmul.f32 %v1391, %v2741
    %v2758 = vmul.f32 %v1392, %v2742
    %v2759 = vmul.f32 %v1393, %v2743
    %v2760 = vmul.f32 %v1394, %v2744
    %v2761 = vmul.f32 %v1395, %v2745
    %v2762 = vld [vmem:[%s1] sm:$0x1]
    %v2764 = vlaneseq
    %v2765 = vshrl.u32 %v2764, 7
    %v2766 = vsub.s32 0, %v2765
    %v2767 = vrot.slane %v2762, %v2766
    %v2769 = vmul.f32 %v2746, %v2767
    %v2770 = vmul.f32 %v2747, %v2767
    %v2771 = vmul.f32 %v2748, %v2767
    %v2772 = vmul.f32 %v2749, %v2767
    %v2773 = vmul.f32 %v2750, %v2767
    %v2774 = vmul.f32 %v2751, %v2767
    %v2775 = vmul.f32 %v2752, %v2767
    %v2776 = vmul.f32 %v2753, %v2767
    %v2777 = vmul.f32 %v2754, %v2767
    %v2778 = vmul.f32 %v2755, %v2767
    %v2779 = vmul.f32 %v2756, %v2767
    %v2780 = vmul.f32 %v2757, %v2767
    %v2781 = vmul.f32 %v2758, %v2767
    %v2782 = vmul.f32 %v2759, %v2767
    %v2783 = vmul.f32 %v2760, %v2767
    %v2784 = vmul.f32 %v2761, %v2767
    %v2785 = vld [vmem:[%s2] sm:$0x1]
    %v2787 = vlaneseq
    %v2788 = vshrl.u32 %v2787, 7
    %v2789 = vsub.s32 0, %v2788
    %v2790 = vrot.slane %v2785, %v2789
    %v2792 = vadd.f32 %v2769, %v2790
    %v2793 = vadd.f32 %v2770, %v2790
    %v2794 = vadd.f32 %v2771, %v2790
    %v2795 = vadd.f32 %v2772, %v2790
    %v2796 = vadd.f32 %v2773, %v2790
    %v2797 = vadd.f32 %v2774, %v2790
    %v2798 = vadd.f32 %v2775, %v2790
    %v2799 = vadd.f32 %v2776, %v2790
    %v2800 = vadd.f32 %v2777, %v2790
    %v2801 = vadd.f32 %v2778, %v2790
    %v2802 = vadd.f32 %v2779, %v2790
    %v2803 = vadd.f32 %v2780, %v2790
    %v2804 = vadd.f32 %v2781, %v2790
    %v2805 = vadd.f32 %v2782, %v2790
    %v2806 = vadd.f32 %v2783, %v2790
    %v2807 = vadd.f32 %v2784, %v2790
    %2808 = vst [vmem:[#allocation7] sm:$0xff] %v2792
    %2809 = vst [vmem:[#allocation7 + $0x8] sm:$0xff] %v2793
    %2810 = vst [vmem:[#allocation7 + $0x10] sm:$0xff] %v2794
    %2811 = vst [vmem:[#allocation7 + $0x18] sm:$0xff] %v2795
    %2812 = vst [vmem:[#allocation7 + $0x20] sm:$0xff] %v2796
    %2813 = vst [vmem:[#allocation7 + $0x28] sm:$0xff] %v2797
    %2814 = vst [vmem:[#allocation7 + $0x30] sm:$0xff] %v2798
    %2815 = vst [vmem:[#allocation7 + $0x38] sm:$0xff] %v2799
    %2816 = vst [vmem:[#allocation7 + $0x40] sm:$0xff] %v2800
    %2817 = vst [vmem:[#allocation7 + $0x48] sm:$0xff] %v2801
    %2818 = vst [vmem:[#allocation7 + $0x50] sm:$0xff] %v2802
    %2819 = vst [vmem:[#allocation7 + $0x58] sm:$0xff] %v2803
    %2820 = vst [vmem:[#allocation7 + $0x60] sm:$0xff] %v2804
    %2821 = vst [vmem:[#allocation7 + $0x68] sm:$0xff] %v2805
    %2822 = vst [vmem:[#allocation7 + $0x70] sm:$0xff] %v2806
    %2823 = vst [vmem:[#allocation7 + $0x78] sm:$0xff] %v2807
    // Predicated region
    $region26: #{tpu_custom_call.1} parent=1 // pred_check
      _
    $region27: #{tpu_custom_call.1} parent=1 // pred_check_branch
      %2825 = sbr.rel (0) target = $region29
    $region28: #{tpu_custom_call.1} parent=1 // pred_region
      %s2827 = ssub.s32 2048, 2048
      %2828 = vsyncadd [#allocation4], %s2827
      %s2829 = sshll.u32 [#allocation7], 4
      %s2830 = int_to_ptr.vmem [resolvable:$true] %s2829
      %2835 = dma.vmem_to_hbm [thread:$0]  %s2830, 2048, %s4, [#allocation4], 128, 128, 8
    $region29: #{tpu_custom_call.1} parent=1 // pred_fallthru
      _
    // Predicated region
    $region30: #{tpu_custom_call.1} parent=1 // pred_check
      _
    $region31: #{tpu_custom_call.1} parent=1 // pred_check_branch
      %2837 = sbr.rel (0) target = $region33
    $region32: #{tpu_custom_call.1} parent=1 // pred_region
      %2838 = dma.done [#allocation4], 2048
    $region33: #{tpu_custom_call.1} parent=1 // pred_fallthru
      _
    %2839 = vsyncpa [#allocation3], 1
    %2840 = vsyncpa [#allocation6], 1
    %2841 = vsyncpa [#allocation4], 1

</llo_original>
